<compile_context>
chip_gen: v7x
topology: tpu7x:2x2x1
jax: 0.10.0
libtpu: 0.0.40
codegen_flags: <defaults>
</compile_context>

<pallas_src>
import functools

import jax
import jax.numpy as jnp
from jax.experimental import pallas as pl
from jax.experimental.pallas import tpu as pltpu

LANE = 128  # feature axes are zero-padded to the 128-lane register width


def _round_up(x, m):
    return ((x + m - 1) // m) * m


def _agg_relu_kernel(a_ref, f_ref, b_ref, o_ref, acc_ref):
    """Layer 1 tile: O = relu(A_hat @ F + b), reduction over grid axis 1."""
    k = pl.program_id(1)

    @pl.when(k == 0)
    def _():
        acc_ref[...] = jnp.zeros_like(acc_ref)

    acc_ref[...] += jnp.dot(a_ref[...], f_ref[...],
                            preferred_element_type=jnp.float32)

    @pl.when(k == pl.num_programs(1) - 1)
    def _():
        o_ref[...] = jnp.maximum(acc_ref[...] + b_ref[...], 0.0).astype(o_ref.dtype)


def _agg_linear_kernel(a_ref, f_ref, w_ref, b_ref, o_ref, acc_ref):
    """Layer 2 tile: O = (A_hat @ F) @ W + b  (== A_hat @ (F @ W) + b)."""
    k = pl.program_id(1)

    @pl.when(k == 0)
    def _():
        acc_ref[...] = jnp.zeros_like(acc_ref)

    acc_ref[...] += jnp.dot(a_ref[...], f_ref[...],
                            preferred_element_type=jnp.float32)

    @pl.when(k == pl.num_programs(1) - 1)
    def _():
        y = jnp.dot(acc_ref[...], w_ref[...],
                    preferred_element_type=jnp.float32) + b_ref[...]
        o_ref[...] = y.astype(o_ref.dtype)


def init_params(key, f_in=3, hid=16, f_out=1):
    k1, k2 = jax.random.split(key)

    def glorot(k, shape):
        lim = jnp.sqrt(6.0 / (shape[0] + shape[1]))
        return jax.random.uniform(k, shape, jnp.float32, -lim, lim)

    return {
        "w1": glorot(k1, (f_in, hid)),
        "b1": jnp.zeros((hid,), jnp.float32),
        "w2": glorot(k2, (hid, f_out)),
        "b2": jnp.zeros((f_out,), jnp.float32),
    }


def stock_gnn_forward(x, edge_index, params, *, tile=256, interpret=False):
    """x: [N, 3] float32, edge_index: [2, E] int32 -> [N] float32 (== x.view(-1))."""
    N, _ = x.shape
    w1, b1 = params["w1"], params["b1"]
    w2, b2 = params["w2"], params["b2"]
    hid, f_out = w1.shape[1], w2.shape[1]

    tm = tk = tile
    Np = _round_up(N, tile)  # pad node count so A_hat tiles evenly

    # ---- glue: dense GCN-normalized adjacency built directly normalized, cast to bf16 ---
    src = edge_index[0].astype(jnp.int32)
    dst = edge_index[1].astype(jnp.int32)
    # PyG gcn_norm: drop pre-existing self loops, then add exactly one per node.
    w_edges = jnp.where(src == dst, 0.0, 1.0).astype(jnp.float32)
    # In-degree at dst (incl. the single self loop), via O(E) scatter — no dense row-sum.
    deg = jnp.ones((N,), jnp.float32).at[dst].add(w_edges)
    d_is = jax.lax.rsqrt(deg)  # deg >= 1 always (self loop), no zero guard needed
    vals = d_is[dst] * w_edges * d_is[src]  # normalized edge weights (0 for self loops)
    diag = jnp.arange(N, dtype=jnp.int32)
    a_hat = jnp.zeros((Np, Np), jnp.float32).at[dst, src].add(vals)
    a_hat = a_hat.at[diag, diag].add(d_is * d_is)  # normalized self loops
    a_hat = a_hat.astype(jnp.bfloat16)  # padded rows/cols stay exactly zero

    # ---- glue: hoist the tiny X @ W1 ([N,3]@[3,16]) out of the kernel, pad to 128 lanes -
    xw1 = jnp.dot(x, w1)  # f32 [N, hid]
    xw1_p = jnp.zeros((Np, LANE), jnp.float32).at[:N, :hid].set(xw1).astype(jnp.bfloat16)
    b1_p = jnp.zeros((1, LANE), jnp.float32).at[0, :hid].set(b1)
    w2_p = jnp.zeros((LANE, LANE), jnp.float32).at[:hid, :f_out].set(w2)
    b2_p = jnp.zeros((1, LANE), jnp.float32).at[0, :f_out].set(b2)

    grid = (Np // tm, Np // tk)
    cparams = pltpu.CompilerParams(
        dimension_semantics=("parallel", "arbitrary"),
        vmem_limit_bytes=64 * 1024 * 1024,
    )

    a_spec = pl.BlockSpec((tm, tk), lambda i, k: (i, k))
    f_spec = pl.BlockSpec((tk, LANE), lambda i, k: (k, 0))
    vec_spec = pl.BlockSpec((1, LANE), lambda i, k: (0, 0))
    mat_spec = pl.BlockSpec((LANE, LANE), lambda i, k: (0, 0))
    o_spec = pl.BlockSpec((tm, LANE), lambda i, k: (i, 0))
    acc_scratch = pltpu.VMEM((tm, LANE), jnp.float32)

    # ---- layer 1: H = relu(A_hat @ (X W1) + b1), bf16 result, f32 accumulation ----------
    h = pl.pallas_call(
        _agg_relu_kernel,
        out_shape=jax.ShapeDtypeStruct((Np, LANE), jnp.bfloat16),
        grid=grid,
        in_specs=[a_spec, f_spec, vec_spec],
        out_specs=o_spec,
        scratch_shapes=[acc_scratch],
        compiler_params=cparams,
        cost_estimate=pl.CostEstimate(
            flops=2 * Np * Np * LANE,
            transcendentals=0,
            bytes_accessed=Np * Np * 2 + 2 * Np * LANE * 2 + Np * LANE * 2,
        ),
        interpret=interpret,
    )(a_hat, xw1_p, b1_p)

    # ---- layer 2: out = A_hat @ (H W2) + b2 == (A_hat @ H) @ W2 + b2 --------------------
    out = pl.pallas_call(
        _agg_linear_kernel,
        out_shape=jax.ShapeDtypeStruct((Np, LANE), jnp.float32),
        grid=grid,
        in_specs=[a_spec, f_spec, mat_spec, vec_spec],
        out_specs=o_spec,
        scratch_shapes=[acc_scratch],
        compiler_params=cparams,
        cost_estimate=pl.CostEstimate(
            flops=2 * Np * Np * LANE + 2 * Np * LANE * LANE,
            transcendentals=0,
            bytes_accessed=Np * Np * 2 + Np * LANE * 2 + 2 * LANE * LANE * 4 + Np * LANE * 4,
        ),
        interpret=interpret,
    )(a_hat, h, w2_p, b2_p)

    # GCNConv(16, 1) gives one channel per node; x.view(-1) flattens it to [N].
    return out[:N, 0]


if __name__ == "__main__":
    key = jax.random.PRNGKey(0)
    k_x, k_e, k_p = jax.random.split(key, 3)

    N, F_IN, E = 16, 3, 32
    x = jax.random.normal(k_x, (N, F_IN), jnp.float32)
    edge_index = jax.random.randint(k_e, (2, E), 0, N, jnp.int32)
    params = init_params(k_p, f_in=F_IN, hid=16, f_out=1)

    fwd = jax.jit(functools.partial(stock_gnn_forward, tile=256))
    out = jax.block_until_ready(fwd(x, edge_index, params))
    assert out.shape == (N,), out.shape

    # pure-JAX f32 reference (same normalization semantics), loose tol for bf16 A_hat/H
    w_e = jnp.where(edge_index[0] == edge_index[1], 0.0, 1.0).astype(jnp.float32)
    a = jnp.zeros((N, N), jnp.float32).at[edge_index[1], edge_index[0]].add(w_e)
    a = a + jnp.eye(N, dtype=jnp.float32)
    d = jax.lax.rsqrt(jnp.sum(a, axis=1))
    ah = d[:, None] * a * d[None, :]
    h_ref = jnp.maximum(ah @ (x @ params["w1"]) + params["b1"], 0.0)
    ref = (ah @ (h_ref @ params["w2"]) + params["b2"])[:, 0]
    assert bool(jnp.all(jnp.isfinite(out))), "non-finite output"
    assert bool(jnp.allclose(out, ref, rtol=5e-2, atol=5e-2)), (out, ref)

    print("KERNEL_OK")
</pallas_src>

<mosaic_0001>
module attributes {stable_mosaic.version = 11 : i64} {
  func.func private @main(%arg0: i32) attributes {dimension_semantics = [#tpu.dimension_semantics<core_parallel>], iteration_bounds = array<i64: 2>, tpu.core_type = #tpu.core_type<sc_scalar_subcore>, window_params = []} {
    return
  }
}

module attributes {stable_mosaic.version = 11 : i64} {
  func.func private @main(%arg0: i32) attributes {dimension_semantics = [#tpu.dimension_semantics<core_parallel>], iteration_bounds = array<i64: 2>, tpu.core_type = #tpu.core_type<sc_scalar_subcore>, window_params = []} {
    return
  }
}

module attributes {stable_mosaic.version = 11 : i64} {
  func.func @_agg_linear_kernel(%arg0: i32, %arg1: i32, %arg2: memref<256x256xbf16, #tpu.memory_space<vmem>>, %arg3: memref<256x128xbf16, #tpu.memory_space<vmem>>, %arg4: memref<128x128xf32, #tpu.memory_space<vmem>>, %arg5: memref<1x128xf32, #tpu.memory_space<vmem>>, %arg6: memref<256x128xf32, #tpu.memory_space<vmem>>, %arg7: memref<256x128xf32, #tpu.memory_space<vmem>>) attributes {dimension_semantics = [#tpu.dimension_semantics<parallel>, #tpu.dimension_semantics<arbitrary>], iteration_bounds = array<i64: 1, 1>, scalar_prefetch = 0 : i64, scratch_operands = 1 : i64, tpu.core_type = #tpu.core_type<tc>, window_params = [{transform_indices = @transform_0, window_bounds = array<i64: 256, 256>}, {transform_indices = @transform_1, window_bounds = array<i64: 256, 128>}, {pipeline_mode = #tpu.pipeline_mode<synchronous>, transform_indices = @transform_2, window_bounds = array<i64: 128, 128>}, {pipeline_mode = #tpu.pipeline_mode<synchronous>, transform_indices = @transform_3, window_bounds = array<i64: 1, 128>}, {transform_indices = @transform_4, window_bounds = array<i64: 256, 128>}]} {
    %c0_i32 = arith.constant 0 : i32
    %0 = arith.cmpi eq, %arg1, %c0_i32 : i32
    %1 = arith.extui %0 : i1 to i32
    %c0_i32_0 = arith.constant 0 : i32
    %2 = arith.cmpi ne, %1, %c0_i32_0 : i32
    scf.if %2 {
      %cst_10 = arith.constant 0.000000e+00 : f32
      %12 = vector.broadcast %cst_10 : f32 to vector<256x128xf32>
      %c0_11 = arith.constant 0 : index
      %c0_12 = arith.constant 0 : index
      %13 = vector.load %arg7[%c0_11, %c0_12] : memref<256x128xf32, #tpu.memory_space<vmem>>, vector<256x128xf32>
      tpu.vector_store %arg7[%c0_11, %c0_12], %12 {strides = array<i32>} : memref<256x128xf32, #tpu.memory_space<vmem>>, vector<256x128xf32>,
    } else {
    }
    %c0 = arith.constant 0 : index
    %c0_1 = arith.constant 0 : index
    %3 = vector.load %arg7[%c0, %c0_1] : memref<256x128xf32, #tpu.memory_space<vmem>>, vector<256x128xf32>
    %c0_2 = arith.constant 0 : index
    %c0_3 = arith.constant 0 : index
    %4 = vector.load %arg2[%c0_2, %c0_3] : memref<256x256xbf16, #tpu.memory_space<vmem>>, vector<256x256xbf16>
    %c0_4 = arith.constant 0 : index
    %c0_5 = arith.constant 0 : index
    %5 = vector.load %arg3[%c0_4, %c0_5] : memref<256x128xbf16, #tpu.memory_space<vmem>>, vector<256x128xbf16>
    %cst = arith.constant dense<0.000000e+00> : vector<256x128xf32>
    %6 = tpu.matmul %4, %5, %cst {dimension_numbers = #tpu.dot_dimension_numbers<[1], [0], [0], [1], [0, 0, 1, 1], [], []>} : vector<256x256xbf16>, vector<256x128xbf16>, vector<256x128xf32> -> vector<256x128xf32>
    %7 = arith.addf %3, %6 : vector<256x128xf32>
    %c0_6 = arith.constant 0 : index
    %c0_7 = arith.constant 0 : index
    %8 = vector.load %arg7[%c0_6, %c0_7] : memref<256x128xf32, #tpu.memory_space<vmem>>, vector<256x128xf32>
    tpu.vector_store %arg7[%c0_6, %c0_7], %7 {strides = array<i32>} : memref<256x128xf32, #tpu.memory_space<vmem>>, vector<256x128xf32>,
    %c0_i32_8 = arith.constant 0 : i32
    %9 = arith.cmpi eq, %arg1, %c0_i32_8 : i32
    %10 = arith.extui %9 : i1 to i32
    %c0_i32_9 = arith.constant 0 : i32
    %11 = arith.cmpi ne, %10, %c0_i32_9 : i32
    scf.if %11 {
      %c0_10 = arith.constant 0 : index
      %c0_11 = arith.constant 0 : index
      %12 = vector.load %arg7[%c0_10, %c0_11] : memref<256x128xf32, #tpu.memory_space<vmem>>, vector<256x128xf32>
      %c0_12 = arith.constant 0 : index
      %c0_13 = arith.constant 0 : index
      %13 = vector.load %arg4[%c0_12, %c0_13] : memref<128x128xf32, #tpu.memory_space<vmem>>, vector<128x128xf32>
      %cst_14 = arith.constant dense<0.000000e+00> : vector<256x128xf32>
      %14 = tpu.matmul %12, %13, %cst_14 {dimension_numbers = #tpu.dot_dimension_numbers<[1], [0], [0], [1], [0, 0, 1, 1], [], []>} : vector<256x128xf32>, vector<128x128xf32>, vector<256x128xf32> -> vector<256x128xf32>
      %c0_15 = arith.constant 0 : index
      %c0_16 = arith.constant 0 : index
      %15 = vector.load %arg5[%c0_15, %c0_16] : memref<1x128xf32, #tpu.memory_space<vmem>>, vector<1x128xf32>
      %16 = vector.broadcast %15 : vector<1x128xf32> to vector<256x128xf32>
      %17 = arith.addf %14, %16 : vector<256x128xf32>
      %c0_17 = arith.constant 0 : index
      %c0_18 = arith.constant 0 : index
      %18 = vector.load %arg6[%c0_17, %c0_18] : memref<256x128xf32, #tpu.memory_space<vmem>>, vector<256x128xf32>
      tpu.vector_store %arg6[%c0_17, %c0_18], %17 {strides = array<i32>} : memref<256x128xf32, #tpu.memory_space<vmem>>, vector<256x128xf32>,
    } else {
    }
    return
  }
  func.func @transform_0(%arg0: i32, %arg1: i32) -> (i32, i32) {
    %c0_i32 = arith.constant 0 : i32
    return %arg0, %arg1 : i32, i32
  }
  func.func @transform_1(%arg0: i32, %arg1: i32) -> (i32, i32) {
    %c0_i32 = arith.constant 0 : i32
    %c0_i32_0 = arith.constant 0 : i32
    return %arg1, %c0_i32 : i32, i32
  }
  func.func @transform_2(%arg0: i32, %arg1: i32) -> (i32, i32) {
    %c0_i32 = arith.constant 0 : i32
    %c0_i32_0 = arith.constant 0 : i32
    %c0_i32_1 = arith.constant 0 : i32
    return %c0_i32, %c0_i32_0 : i32, i32
  }
  func.func @transform_3(%arg0: i32, %arg1: i32) -> (i32, i32) {
    %c0_i32 = arith.constant 0 : i32
    %c0_i32_0 = arith.constant 0 : i32
    %c0_i32_1 = arith.constant 0 : i32
    return %c0_i32, %c0_i32_0 : i32, i32
  }
  func.func @transform_4(%arg0: i32, %arg1: i32) -> (i32, i32) {
    %c0_i32 = arith.constant 0 : i32
    %c0_i32_0 = arith.constant 0 : i32
    return %arg0, %c0_i32 : i32, i32
  }
}

module attributes {stable_mosaic.version = 11 : i64} {
  func.func @_agg_relu_kernel(%arg0: i32, %arg1: i32, %arg2: memref<256x256xbf16, #tpu.memory_space<vmem>>, %arg3: memref<256x128xbf16, #tpu.memory_space<vmem>>, %arg4: memref<1x128xf32, #tpu.memory_space<vmem>>, %arg5: memref<256x128xbf16, #tpu.memory_space<vmem>>, %arg6: memref<256x128xf32, #tpu.memory_space<vmem>>) attributes {dimension_semantics = [#tpu.dimension_semantics<parallel>, #tpu.dimension_semantics<arbitrary>], iteration_bounds = array<i64: 1, 1>, scalar_prefetch = 0 : i64, scratch_operands = 1 : i64, tpu.core_type = #tpu.core_type<tc>, window_params = [{transform_indices = @transform_0, window_bounds = array<i64: 256, 256>}, {transform_indices = @transform_1, window_bounds = array<i64: 256, 128>}, {pipeline_mode = #tpu.pipeline_mode<synchronous>, transform_indices = @transform_2, window_bounds = array<i64: 1, 128>}, {transform_indices = @transform_3, window_bounds = array<i64: 256, 128>}]} {
    %c0_i32 = arith.constant 0 : i32
    %0 = arith.cmpi eq, %arg1, %c0_i32 : i32
    %1 = arith.extui %0 : i1 to i32
    %c0_i32_0 = arith.constant 0 : i32
    %2 = arith.cmpi ne, %1, %c0_i32_0 : i32
    scf.if %2 {
      %cst_10 = arith.constant 0.000000e+00 : f32
      %12 = vector.broadcast %cst_10 : f32 to vector<256x128xf32>
      %c0_11 = arith.constant 0 : index
      %c0_12 = arith.constant 0 : index
      %13 = vector.load %arg6[%c0_11, %c0_12] : memref<256x128xf32, #tpu.memory_space<vmem>>, vector<256x128xf32>
      tpu.vector_store %arg6[%c0_11, %c0_12], %12 {strides = array<i32>} : memref<256x128xf32, #tpu.memory_space<vmem>>, vector<256x128xf32>,
    } else {
    }
    %c0 = arith.constant 0 : index
    %c0_1 = arith.constant 0 : index
    %3 = vector.load %arg6[%c0, %c0_1] : memref<256x128xf32, #tpu.memory_space<vmem>>, vector<256x128xf32>
    %c0_2 = arith.constant 0 : index
    %c0_3 = arith.constant 0 : index
    %4 = vector.load %arg2[%c0_2, %c0_3] : memref<256x256xbf16, #tpu.memory_space<vmem>>, vector<256x256xbf16>
    %c0_4 = arith.constant 0 : index
    %c0_5 = arith.constant 0 : index
    %5 = vector.load %arg3[%c0_4, %c0_5] : memref<256x128xbf16, #tpu.memory_space<vmem>>, vector<256x128xbf16>
    %cst = arith.constant dense<0.000000e+00> : vector<256x128xf32>
    %6 = tpu.matmul %4, %5, %cst {dimension_numbers = #tpu.dot_dimension_numbers<[1], [0], [0], [1], [0, 0, 1, 1], [], []>} : vector<256x256xbf16>, vector<256x128xbf16>, vector<256x128xf32> -> vector<256x128xf32>
    %7 = arith.addf %3, %6 : vector<256x128xf32>
    %c0_6 = arith.constant 0 : index
    %c0_7 = arith.constant 0 : index
    %8 = vector.load %arg6[%c0_6, %c0_7] : memref<256x128xf32, #tpu.memory_space<vmem>>, vector<256x128xf32>
    tpu.vector_store %arg6[%c0_6, %c0_7], %7 {strides = array<i32>} : memref<256x128xf32, #tpu.memory_space<vmem>>, vector<256x128xf32>,
    %c0_i32_8 = arith.constant 0 : i32
    %9 = arith.cmpi eq, %arg1, %c0_i32_8 : i32
    %10 = arith.extui %9 : i1 to i32
    %c0_i32_9 = arith.constant 0 : i32
    %11 = arith.cmpi ne, %10, %c0_i32_9 : i32
    scf.if %11 {
      %c0_10 = arith.constant 0 : index
      %c0_11 = arith.constant 0 : index
      %12 = vector.load %arg6[%c0_10, %c0_11] : memref<256x128xf32, #tpu.memory_space<vmem>>, vector<256x128xf32>
      %c0_12 = arith.constant 0 : index
      %c0_13 = arith.constant 0 : index
      %13 = vector.load %arg4[%c0_12, %c0_13] : memref<1x128xf32, #tpu.memory_space<vmem>>, vector<1x128xf32>
      %14 = vector.broadcast %13 : vector<1x128xf32> to vector<256x128xf32>
      %15 = arith.addf %12, %14 : vector<256x128xf32>
      %cst_14 = arith.constant 0.000000e+00 : f32
      %16 = vector.broadcast %cst_14 : f32 to vector<256x128xf32>
      %17 = arith.maximumf %15, %16 : vector<256x128xf32>
      %18 = arith.truncf %17 : vector<256x128xf32> to vector<256x128xbf16>
      %c0_15 = arith.constant 0 : index
      %c0_16 = arith.constant 0 : index
      %19 = vector.load %arg5[%c0_15, %c0_16] : memref<256x128xbf16, #tpu.memory_space<vmem>>, vector<256x128xbf16>
      tpu.vector_store %arg5[%c0_15, %c0_16], %18 {strides = array<i32>} : memref<256x128xbf16, #tpu.memory_space<vmem>>, vector<256x128xbf16>,
    } else {
    }
    return
  }
  func.func @transform_0(%arg0: i32, %arg1: i32) -> (i32, i32) {
    %c0_i32 = arith.constant 0 : i32
    return %arg0, %arg1 : i32, i32
  }
  func.func @transform_1(%arg0: i32, %arg1: i32) -> (i32, i32) {
    %c0_i32 = arith.constant 0 : i32
    %c0_i32_0 = arith.constant 0 : i32
    return %arg1, %c0_i32 : i32, i32
  }
  func.func @transform_2(%arg0: i32, %arg1: i32) -> (i32, i32) {
    %c0_i32 = arith.constant 0 : i32
    %c0_i32_0 = arith.constant 0 : i32
    %c0_i32_1 = arith.constant 0 : i32
    return %c0_i32, %c0_i32_0 : i32, i32
  }
  func.func @transform_3(%arg0: i32, %arg1: i32) -> (i32, i32) {
    %c0_i32 = arith.constant 0 : i32
    %c0_i32_0 = arith.constant 0 : i32
    return %arg0, %c0_i32 : i32, i32
  }
}

</mosaic_0001>

<llo_original>
// kernel: stock_gnn_forward.3
$region0: #{stock_gnn_forward.3}
  #allocation0 [shape = 'u32[]', space=smem, size = 0x4, offset = 0x4, fixed_abs, tag = 'smem constant byte address 0x4 - core index']
  #allocation1 [shape = 'u32[144,128]{1,0:T(1,128)}', space=vmem, size = 0x12000, scoped, tag = 'internal scratch']
  #allocation2 [shape = 'f32[256,128]{1,0:T(8,128)}', space=vmem, size = 0x20000, scoped, tag = 'scratch operand']
  %s0 = inlined_call_operand.hbm [shape: bf16[256,256], index: 0, kind: input, shape index: {}]
  %s1 = inlined_call_operand.hbm [shape: bf16[256,128], index: 1, kind: input, shape index: {}]
  %s2 = inlined_call_operand.hbm [shape: f32[128,128], index: 2, kind: input, shape index: {}]
  %s3 = inlined_call_operand.hbm [shape: f32[1,128], index: 3, kind: input, shape index: {}]
  %s4 = inlined_call_operand.hbm [shape: f32[256,128], index: 4, kind: output, shape index: {}]
  %s5 = sld [smem:[#allocation0]]
  $region50: #{stock_gnn_forward.3} parent=0
    _
  %s7 = ssub.s32 1, %s5
  %s8 = scalar_select 0, %s7, %s5
  $region1: #{stock_gnn_forward.3} parent=0
    #allocation3 [shape = 'u8[131072]{0}', space=vmem, size = 0x20000, scoped, tag = 'input window, operand 0, single buffered']
    #allocation4 [shape = 's32[1]{0}', space=sflag, size = 0x4, scoped, tag = 'scoped memory for stock_gnn_forward.3']
    #allocation5 [shape = 's32[1]{0}', space=sflag, size = 0x4, scoped, tag = 'scoped memory for stock_gnn_forward.3']
    #allocation6 [shape = 'u8[65536]{0}', space=vmem, size = 0x10000, scoped, tag = 'input window, operand 1, single buffered']
    #allocation7 [shape = 's32[1]{0}', space=sflag, size = 0x4, scoped, tag = 'scoped memory for stock_gnn_forward.3']
    #allocation8 [shape = 'u8[65536]{0}', space=vmem, size = 0x10000, scoped, tag = 'input window, operand 2, single buffered']
    #allocation9 [shape = 'u8[512]{0}', space=vmem, size = 0x400, scoped, tag = 'input window, operand 3, single buffered']
    #allocation10 [shape = 's32[1]{0}', space=sflag, size = 0x4, scoped, tag = 'scoped memory for stock_gnn_forward.3']
    #allocation11 [shape = 'u8[131072]{0}', space=vmem, size = 0x20000, scoped, tag = 'output window, operand 0, single buffered']
    %9 = vsyncpa [#allocation4], 0
    %10 = vsyncpa [#allocation7], 0
    %11 = vsyncpa [#allocation10], 0
    %12 = vsyncpa [#allocation5], 0
    // Predicated region
    $region2: #{stock_gnn_forward.3} parent=1 // pred_check
      _
    $region3: #{stock_gnn_forward.3} parent=1 // pred_check_branch
      %14 = sbr.rel (0) target = $region5
    $region4: #{stock_gnn_forward.3} parent=1 // pred_region
      %s16 = ssub.s32 4096, 4096
      %17 = vsyncadd [#allocation4], %s16
      %s18 = sshll.u32 [#allocation3], 4
      %s19 = int_to_ptr.vmem [resolvable:$true] %s18
      %24 = dma.hbm_to_vmem [thread:$0]  %s0, 4096, %s19, [#allocation4], 128, 128, 8
    $region5: #{stock_gnn_forward.3} parent=1 // pred_fallthru
      _
    // Predicated region
    $region6: #{stock_gnn_forward.3} parent=1 // pred_check
      _
    $region7: #{stock_gnn_forward.3} parent=1 // pred_check_branch
      %26 = sbr.rel (0) target = $region9
    $region8: #{stock_gnn_forward.3} parent=1 // pred_region
      %s28 = ssub.s32 2048, 2048
      %29 = vsyncadd [#allocation7], %s28
      %s30 = sshll.u32 [#allocation6], 4
      %s31 = int_to_ptr.vmem [resolvable:$true] %s30
      %36 = dma.hbm_to_vmem [thread:$0]  %s1, 2048, %s31, [#allocation7], 64, 64, 4
    $region9: #{stock_gnn_forward.3} parent=1 // pred_fallthru
      _
    // Predicated region
    $region10: #{stock_gnn_forward.3} parent=1 // pred_check
      _
    $region11: #{stock_gnn_forward.3} parent=1 // pred_check_branch
      %38 = sbr.rel (0) target = $region13
    $region12: #{stock_gnn_forward.3} parent=1 // pred_region
      %s40 = ssub.s32 2048, 2048
      %41 = vsyncadd [#allocation7], %s40
      %s42 = sshll.u32 [#allocation8], 4
      %s43 = int_to_ptr.vmem [resolvable:$true] %s42
      %48 = dma.hbm_to_vmem [thread:$0]  %s2, 2048, %s43, [#allocation7], 128, 128, 8
    $region13: #{stock_gnn_forward.3} parent=1 // pred_fallthru
      _
    // Predicated region
    $region14: #{stock_gnn_forward.3} parent=1 // pred_check
      _
    $region15: #{stock_gnn_forward.3} parent=1 // pred_check_branch
      %50 = sbr.rel (0) target = $region17
    $region16: #{stock_gnn_forward.3} parent=1 // pred_region
      %s52 = ssub.s32 16, 16
      %53 = vsyncadd [#allocation10], %s52
      %s55 = sshll.u32 [#allocation9], 4
      %s56 = int_to_ptr.vmem [resolvable:$true] %s55
      %58 = dma.hbm_to_vmem [thread:$0]  %s3, 16, %s56, [#allocation10]
    $region17: #{stock_gnn_forward.3} parent=1 // pred_fallthru
      _
    // Predicated region
    $region18: #{stock_gnn_forward.3} parent=1 // pred_check
      _
    $region19: #{stock_gnn_forward.3} parent=1 // pred_check_branch
      %60 = sbr.rel (0) target = $region21
    $region20: #{stock_gnn_forward.3} parent=1 // pred_region
      %61 = dma.done [#allocation4], 4096
    $region21: #{stock_gnn_forward.3} parent=1 // pred_fallthru
      _
    // Predicated region
    $region22: #{stock_gnn_forward.3} parent=1 // pred_check
      _
    $region23: #{stock_gnn_forward.3} parent=1 // pred_check_branch
      %63 = sbr.rel (0) target = $region25
    $region24: #{stock_gnn_forward.3} parent=1 // pred_region
      %64 = dma.done [#allocation7], 2048
    $region25: #{stock_gnn_forward.3} parent=1 // pred_fallthru
      _
    // Predicated region
    $region26: #{stock_gnn_forward.3} parent=1 // pred_check
      _
    $region27: #{stock_gnn_forward.3} parent=1 // pred_check_branch
      %66 = sbr.rel (0) target = $region29
    $region28: #{stock_gnn_forward.3} parent=1 // pred_region
      %67 = dma.done [#allocation7], 2048
    $region29: #{stock_gnn_forward.3} parent=1 // pred_fallthru
      _
    // Predicated region
    $region30: #{stock_gnn_forward.3} parent=1 // pred_check
      _
    $region31: #{stock_gnn_forward.3} parent=1 // pred_check_branch
      %69 = sbr.rel (0) target = $region33
    $region32: #{stock_gnn_forward.3} parent=1 // pred_region
      %70 = dma.done [#allocation10], 16
    $region33: #{stock_gnn_forward.3} parent=1 // pred_fallthru
      _
    %p72 = scmp.eq.s32.totalorder 0, 0
    // Predicated region
    $region34: #{stock_gnn_forward.3} parent=1 // pred_check
      %p73 = pneg %p72
    $region35: #{stock_gnn_forward.3} parent=1 // pred_check_branch
      %75 = sbr.rel (%p73) target = $region37
    $region36: #{stock_gnn_forward.3} parent=1 // pred_region
      %76 = vst [vmem:[#allocation2] sm:$0xff] 0.0
      %77 = vst [vmem:[#allocation2 + $0x8] sm:$0xff] 0.0
      %78 = vst [vmem:[#allocation2 + $0x10] sm:$0xff] 0.0
      %79 = vst [vmem:[#allocation2 + $0x18] sm:$0xff] 0.0
      %80 = vst [vmem:[#allocation2 + $0x20] sm:$0xff] 0.0
      %81 = vst [vmem:[#allocation2 + $0x28] sm:$0xff] 0.0
      %82 = vst [vmem:[#allocation2 + $0x30] sm:$0xff] 0.0
      %83 = vst [vmem:[#allocation2 + $0x38] sm:$0xff] 0.0
      %84 = vst [vmem:[#allocation2 + $0x40] sm:$0xff] 0.0
      %85 = vst [vmem:[#allocation2 + $0x48] sm:$0xff] 0.0
      %86 = vst [vmem:[#allocation2 + $0x50] sm:$0xff] 0.0
      %87 = vst [vmem:[#allocation2 + $0x58] sm:$0xff] 0.0
      %88 = vst [vmem:[#allocation2 + $0x60] sm:$0xff] 0.0
      %89 = vst [vmem:[#allocation2 + $0x68] sm:$0xff] 0.0
      %90 = vst [vmem:[#allocation2 + $0x70] sm:$0xff] 0.0
      %91 = vst [vmem:[#allocation2 + $0x78] sm:$0xff] 0.0
      %92 = vst [vmem:[#allocation2 + $0x80] sm:$0xff] 0.0
      %93 = vst [vmem:[#allocation2 + $0x88] sm:$0xff] 0.0
      %94 = vst [vmem:[#allocation2 + $0x90] sm:$0xff] 0.0
      %95 = vst [vmem:[#allocation2 + $0x98] sm:$0xff] 0.0
      %96 = vst [vmem:[#allocation2 + $0xa0] sm:$0xff] 0.0
      %97 = vst [vmem:[#allocation2 + $0xa8] sm:$0xff] 0.0
      %98 = vst [vmem:[#allocation2 + $0xb0] sm:$0xff] 0.0
      %99 = vst [vmem:[#allocation2 + $0xb8] sm:$0xff] 0.0
      %100 = vst [vmem:[#allocation2 + $0xc0] sm:$0xff] 0.0
      %101 = vst [vmem:[#allocation2 + $0xc8] sm:$0xff] 0.0
      %102 = vst [vmem:[#allocation2 + $0xd0] sm:$0xff] 0.0
      %103 = vst [vmem:[#allocation2 + $0xd8] sm:$0xff] 0.0
      %104 = vst [vmem:[#allocation2 + $0xe0] sm:$0xff] 0.0
      %105 = vst [vmem:[#allocation2 + $0xe8] sm:$0xff] 0.0
      %106 = vst [vmem:[#allocation2 + $0xf0] sm:$0xff] 0.0
      %107 = vst [vmem:[#allocation2 + $0xf8] sm:$0xff] 0.0
    $region37: #{stock_gnn_forward.3} parent=1 // pred_fallthru
      _
    %v108 = vld [vmem:[#allocation2] sm:$0xff]
    %v109 = vld [vmem:[#allocation2 + $0x8] sm:$0xff]
    %v110 = vld [vmem:[#allocation2 + $0x10] sm:$0xff]
    %v111 = vld [vmem:[#allocation2 + $0x18] sm:$0xff]
    %v112 = vld [vmem:[#allocation2 + $0x20] sm:$0xff]
    %v113 = vld [vmem:[#allocation2 + $0x28] sm:$0xff]
    %v114 = vld [vmem:[#allocation2 + $0x30] sm:$0xff]
    %v115 = vld [vmem:[#allocation2 + $0x38] sm:$0xff]
    %v116 = vld [vmem:[#allocation2 + $0x40] sm:$0xff]
    %v117 = vld [vmem:[#allocation2 + $0x48] sm:$0xff]
    %v118 = vld [vmem:[#allocation2 + $0x50] sm:$0xff]
    %v119 = vld [vmem:[#allocation2 + $0x58] sm:$0xff]
    %v120 = vld [vmem:[#allocation2 + $0x60] sm:$0xff]
    %v121 = vld [vmem:[#allocation2 + $0x68] sm:$0xff]
    %v122 = vld [vmem:[#allocation2 + $0x70] sm:$0xff]
    %v123 = vld [vmem:[#allocation2 + $0x78] sm:$0xff]
    %v124 = vld [vmem:[#allocation2 + $0x80] sm:$0xff]
    %v125 = vld [vmem:[#allocation2 + $0x88] sm:$0xff]
    %v126 = vld [vmem:[#allocation2 + $0x90] sm:$0xff]
    %v127 = vld [vmem:[#allocation2 + $0x98] sm:$0xff]
    %v128 = vld [vmem:[#allocation2 + $0xa0] sm:$0xff]
    %v129 = vld [vmem:[#allocation2 + $0xa8] sm:$0xff]
    %v130 = vld [vmem:[#allocation2 + $0xb0] sm:$0xff]
    %v131 = vld [vmem:[#allocation2 + $0xb8] sm:$0xff]
    %v132 = vld [vmem:[#allocation2 + $0xc0] sm:$0xff]
    %v133 = vld [vmem:[#allocation2 + $0xc8] sm:$0xff]
    %v134 = vld [vmem:[#allocation2 + $0xd0] sm:$0xff]
    %v135 = vld [vmem:[#allocation2 + $0xd8] sm:$0xff]
    %v136 = vld [vmem:[#allocation2 + $0xe0] sm:$0xff]
    %v137 = vld [vmem:[#allocation2 + $0xe8] sm:$0xff]
    %v138 = vld [vmem:[#allocation2 + $0xf0] sm:$0xff]
    %v139 = vld [vmem:[#allocation2 + $0xf8] sm:$0xff]
    %v140 = vld [vmem:[#allocation3] sm:$0xff]
    %v141 = vld [vmem:[#allocation3 + $0x8] sm:$0xff]
    %v142 = vld [vmem:[#allocation3 + $0x10] sm:$0xff]
    %v143 = vld [vmem:[#allocation3 + $0x18] sm:$0xff]
    %v144 = vld [vmem:[#allocation3 + $0x20] sm:$0xff]
    %v145 = vld [vmem:[#allocation3 + $0x28] sm:$0xff]
    %v146 = vld [vmem:[#allocation3 + $0x30] sm:$0xff]
    %v147 = vld [vmem:[#allocation3 + $0x38] sm:$0xff]
    %v148 = vld [vmem:[#allocation3 + $0x40] sm:$0xff]
    %v149 = vld [vmem:[#allocation3 + $0x48] sm:$0xff]
    %v150 = vld [vmem:[#allocation3 + $0x50] sm:$0xff]
    %v151 = vld [vmem:[#allocation3 + $0x58] sm:$0xff]
    %v152 = vld [vmem:[#allocation3 + $0x60] sm:$0xff]
    %v153 = vld [vmem:[#allocation3 + $0x68] sm:$0xff]
    %v154 = vld [vmem:[#allocation3 + $0x70] sm:$0xff]
    %v155 = vld [vmem:[#allocation3 + $0x78] sm:$0xff]
    %v156 = vld [vmem:[#allocation3 + $0x80] sm:$0xff]
    %v157 = vld [vmem:[#allocation3 + $0x88] sm:$0xff]
    %v158 = vld [vmem:[#allocation3 + $0x90] sm:$0xff]
    %v159 = vld [vmem:[#allocation3 + $0x98] sm:$0xff]
    %v160 = vld [vmem:[#allocation3 + $0xa0] sm:$0xff]
    %v161 = vld [vmem:[#allocation3 + $0xa8] sm:$0xff]
    %v162 = vld [vmem:[#allocation3 + $0xb0] sm:$0xff]
    %v163 = vld [vmem:[#allocation3 + $0xb8] sm:$0xff]
    %v164 = vld [vmem:[#allocation3 + $0xc0] sm:$0xff]
    %v165 = vld [vmem:[#allocation3 + $0xc8] sm:$0xff]
    %v166 = vld [vmem:[#allocation3 + $0xd0] sm:$0xff]
    %v167 = vld [vmem:[#allocation3 + $0xd8] sm:$0xff]
    %v168 = vld [vmem:[#allocation3 + $0xe0] sm:$0xff]
    %v169 = vld [vmem:[#allocation3 + $0xe8] sm:$0xff]
    %v170 = vld [vmem:[#allocation3 + $0xf0] sm:$0xff]
    %v171 = vld [vmem:[#allocation3 + $0xf8] sm:$0xff]
    %v172 = vld [vmem:[#allocation6] sm:$0xf]
    %v173 = vld [vmem:[#allocation6 + $0x4] sm:$0xf]
    %v174 = vld [vmem:[#allocation6 + $0x8] sm:$0xf]
    %v175 = vld [vmem:[#allocation6 + $0xc] sm:$0xf]
    %v176 = vld [vmem:[#allocation6 + $0x10] sm:$0xf]
    %v177 = vld [vmem:[#allocation6 + $0x14] sm:$0xf]
    %v178 = vld [vmem:[#allocation6 + $0x18] sm:$0xf]
    %v179 = vld [vmem:[#allocation6 + $0x1c] sm:$0xf]
    %v180 = vld [vmem:[#allocation6 + $0x20] sm:$0xf]
    %v181 = vld [vmem:[#allocation6 + $0x24] sm:$0xf]
    %v182 = vld [vmem:[#allocation6 + $0x28] sm:$0xf]
    %v183 = vld [vmem:[#allocation6 + $0x2c] sm:$0xf]
    %v184 = vld [vmem:[#allocation6 + $0x30] sm:$0xf]
    %v185 = vld [vmem:[#allocation6 + $0x34] sm:$0xf]
    %v186 = vld [vmem:[#allocation6 + $0x38] sm:$0xf]
    %v187 = vld [vmem:[#allocation6 + $0x3c] sm:$0xf]
    %v188 = vld [vmem:[#allocation6 + $0x40] sm:$0xf]
    %v189 = vld [vmem:[#allocation6 + $0x44] sm:$0xf]
    %v190 = vld [vmem:[#allocation6 + $0x48] sm:$0xf]
    %v191 = vld [vmem:[#allocation6 + $0x4c] sm:$0xf]
    %v192 = vld [vmem:[#allocation6 + $0x50] sm:$0xf]
    %v193 = vld [vmem:[#allocation6 + $0x54] sm:$0xf]
    %v194 = vld [vmem:[#allocation6 + $0x58] sm:$0xf]
    %v195 = vld [vmem:[#allocation6 + $0x5c] sm:$0xf]
    %v196 = vld [vmem:[#allocation6 + $0x60] sm:$0xf]
    %v197 = vld [vmem:[#allocation6 + $0x64] sm:$0xf]
    %v198 = vld [vmem:[#allocation6 + $0x68] sm:$0xf]
    %v199 = vld [vmem:[#allocation6 + $0x6c] sm:$0xf]
    %v200 = vld [vmem:[#allocation6 + $0x70] sm:$0xf]
    %v201 = vld [vmem:[#allocation6 + $0x74] sm:$0xf]
    %v202 = vld [vmem:[#allocation6 + $0x78] sm:$0xf]
    %v203 = vld [vmem:[#allocation6 + $0x7c] sm:$0xf]
    %v236 = vunpack.c.l.b16 %v140
    %v237 = vunpack.c.h.b16 %v140
    %v238 = vunpack.c.l.b16 %v141
    %v239 = vunpack.c.h.b16 %v141
    %v240 = vunpack.c.l.b16 %v142
    %v241 = vunpack.c.h.b16 %v142
    %v242 = vunpack.c.l.b16 %v143
    %v243 = vunpack.c.h.b16 %v143
    %v244 = vunpack.c.l.b16 %v144
    %v245 = vunpack.c.h.b16 %v144
    %v246 = vunpack.c.l.b16 %v145
    %v247 = vunpack.c.h.b16 %v145
    %v248 = vunpack.c.l.b16 %v146
    %v249 = vunpack.c.h.b16 %v146
    %v250 = vunpack.c.l.b16 %v147
    %v251 = vunpack.c.h.b16 %v147
    %v252 = vunpack.c.l.b16 %v148
    %v253 = vunpack.c.h.b16 %v148
    %v254 = vunpack.c.l.b16 %v149
    %v255 = vunpack.c.h.b16 %v149
    %v256 = vunpack.c.l.b16 %v150
    %v257 = vunpack.c.h.b16 %v150
    %v258 = vunpack.c.l.b16 %v151
    %v259 = vunpack.c.h.b16 %v151
    %v260 = vunpack.c.l.b16 %v152
    %v261 = vunpack.c.h.b16 %v152
    %v262 = vunpack.c.l.b16 %v153
    %v263 = vunpack.c.h.b16 %v153
    %v264 = vunpack.c.l.b16 %v154
    %v265 = vunpack.c.h.b16 %v154
    %v266 = vunpack.c.l.b16 %v155
    %v267 = vunpack.c.h.b16 %v155
    %v268 = vunpack.c.l.b16 %v156
    %v269 = vunpack.c.h.b16 %v156
    %v270 = vunpack.c.l.b16 %v157
    %v271 = vunpack.c.h.b16 %v157
    %v272 = vunpack.c.l.b16 %v158
    %v273 = vunpack.c.h.b16 %v158
    %v274 = vunpack.c.l.b16 %v159
    %v275 = vunpack.c.h.b16 %v159
    %v276 = vunpack.c.l.b16 %v160
    %v277 = vunpack.c.h.b16 %v160
    %v278 = vunpack.c.l.b16 %v161
    %v279 = vunpack.c.h.b16 %v161
    %v280 = vunpack.c.l.b16 %v162
    %v281 = vunpack.c.h.b16 %v162
    %v282 = vunpack.c.l.b16 %v163
    %v283 = vunpack.c.h.b16 %v163
    %v284 = vunpack.c.l.b16 %v164
    %v285 = vunpack.c.h.b16 %v164
    %v286 = vunpack.c.l.b16 %v165
    %v287 = vunpack.c.h.b16 %v165
    %v288 = vunpack.c.l.b16 %v166
    %v289 = vunpack.c.h.b16 %v166
    %v290 = vunpack.c.l.b16 %v167
    %v291 = vunpack.c.h.b16 %v167
    %v292 = vunpack.c.l.b16 %v168
    %v293 = vunpack.c.h.b16 %v168
    %v294 = vunpack.c.l.b16 %v169
    %v295 = vunpack.c.h.b16 %v169
    %v296 = vunpack.c.l.b16 %v170
    %v297 = vunpack.c.h.b16 %v170
    %v298 = vunpack.c.l.b16 %v171
    %v299 = vunpack.c.h.b16 %v171
    %v300 = vpack.c.b16 %v238, %v236
    %v301 = vpack.c.b16 %v239, %v237
    %v302 = vpack.c.b16 %v242, %v240
    %v303 = vpack.c.b16 %v243, %v241
    %v304 = vpack.c.b16 %v246, %v244
    %v305 = vpack.c.b16 %v247, %v245
    %v306 = vpack.c.b16 %v250, %v248
    %v307 = vpack.c.b16 %v251, %v249
    %v308 = vpack.c.b16 %v254, %v252
    %v309 = vpack.c.b16 %v255, %v253
    %v310 = vpack.c.b16 %v258, %v256
    %v311 = vpack.c.b16 %v259, %v257
    %v312 = vpack.c.b16 %v262, %v260
    %v313 = vpack.c.b16 %v263, %v261
    %v314 = vpack.c.b16 %v266, %v264
    %v315 = vpack.c.b16 %v267, %v265
    %v316 = vpack.c.b16 %v270, %v268
    %v317 = vpack.c.b16 %v271, %v269
    %v318 = vpack.c.b16 %v274, %v272
    %v319 = vpack.c.b16 %v275, %v273
    %v320 = vpack.c.b16 %v278, %v276
    %v321 = vpack.c.b16 %v279, %v277
    %v322 = vpack.c.b16 %v282, %v280
    %v323 = vpack.c.b16 %v283, %v281
    %v324 = vpack.c.b16 %v286, %v284
    %v325 = vpack.c.b16 %v287, %v285
    %v326 = vpack.c.b16 %v290, %v288
    %v327 = vpack.c.b16 %v291, %v289
    %v328 = vpack.c.b16 %v294, %v292
    %v329 = vpack.c.b16 %v295, %v293
    %v330 = vpack.c.b16 %v298, %v296
    %v331 = vpack.c.b16 %v299, %v297
    %v396 = vunpack.c.l.b16 %v172
    %v397 = vunpack.c.l.b16 %v173
    %v398 = vunpack.c.l.b16 %v174
    %v399 = vunpack.c.l.b16 %v175
    %v400 = vunpack.c.l.b16 %v176
    %v401 = vunpack.c.l.b16 %v177
    %v402 = vunpack.c.l.b16 %v178
    %v403 = vunpack.c.l.b16 %v179
    %v404 = vunpack.c.l.b16 %v180
    %v405 = vunpack.c.l.b16 %v181
    %v406 = vunpack.c.l.b16 %v182
    %v407 = vunpack.c.l.b16 %v183
    %v408 = vunpack.c.l.b16 %v184
    %v409 = vunpack.c.l.b16 %v185
    %v410 = vunpack.c.l.b16 %v186
    %v411 = vunpack.c.l.b16 %v187
    %v412 = vunpack.c.l.b16 %v188
    %v413 = vunpack.c.l.b16 %v189
    %v414 = vunpack.c.l.b16 %v190
    %v415 = vunpack.c.l.b16 %v191
    %v416 = vunpack.c.l.b16 %v192
    %v417 = vunpack.c.l.b16 %v193
    %v418 = vunpack.c.l.b16 %v194
    %v419 = vunpack.c.l.b16 %v195
    %v420 = vunpack.c.l.b16 %v196
    %v421 = vunpack.c.l.b16 %v197
    %v422 = vunpack.c.l.b16 %v198
    %v423 = vunpack.c.l.b16 %v199
    %v424 = vunpack.c.l.b16 %v200
    %v425 = vunpack.c.l.b16 %v201
    %v426 = vunpack.c.l.b16 %v202
    %v427 = vunpack.c.l.b16 %v203
    %v428 = vpack.c.b16 %v397, %v396
    %v429 = vpack.c.b16 %v399, %v398
    %v430 = vpack.c.b16 %v401, %v400
    %v431 = vpack.c.b16 %v403, %v402
    %v432 = vpack.c.b16 %v405, %v404
    %v433 = vpack.c.b16 %v407, %v406
    %v434 = vpack.c.b16 %v409, %v408
    %v435 = vpack.c.b16 %v411, %v410
    %v436 = vpack.c.b16 %v413, %v412
    %v437 = vpack.c.b16 %v415, %v414
    %v438 = vpack.c.b16 %v417, %v416
    %v439 = vpack.c.b16 %v419, %v418
    %v440 = vpack.c.b16 %v421, %v420
    %v441 = vpack.c.b16 %v423, %v422
    %v442 = vpack.c.b16 %v425, %v424
    %v443 = vpack.c.b16 %v427, %v426
    %460 = vmatprep.subr.bf16.mxu0 0
    %461 = vmatpush1.bf16.msra.mxu0 %v428
    %462 = vmatprep.subr.bf16.mxu0 0
    %463 = vmatpush1.bf16.msra.mxu0 %v429
    %464 = vmatprep.subr.bf16.mxu0 0
    %465 = vmatpush1.bf16.msra.mxu0 %v430
    %466 = vmatprep.subr.bf16.mxu0 0
    %467 = vmatpush1.bf16.msra.mxu0 %v431
    %468 = vmatprep.subr.bf16.mxu0 0
    %469 = vmatpush1.bf16.msra.mxu0 %v432
    %470 = vmatprep.subr.bf16.mxu0 0
    %471 = vmatpush1.bf16.msra.mxu0 %v433
    %472 = vmatprep.subr.bf16.mxu0 0
    %473 = vmatpush1.bf16.msra.mxu0 %v434
    %474 = vmatprep.subr.bf16.mxu0 0
    %475 = vmatpush1.bf16.msra.mxu0 %v435
    %476 = vmatprep.subr.bf16.mxu0 0
    %477 = vmatpush1.bf16.msra.mxu0 %v436
    %478 = vmatprep.subr.bf16.mxu0 0
    %479 = vmatpush1.bf16.msra.mxu0 %v437
    %480 = vmatprep.subr.bf16.mxu0 0
    %481 = vmatpush1.bf16.msra.mxu0 %v438
    %482 = vmatprep.subr.bf16.mxu0 0
    %483 = vmatpush1.bf16.msra.mxu0 %v439
    %484 = vmatprep.subr.bf16.mxu0 0
    %485 = vmatpush1.bf16.msra.mxu0 %v440
    %486 = vmatprep.subr.bf16.mxu0 0
    %487 = vmatpush1.bf16.msra.mxu0 %v441
    %488 = vmatprep.subr.bf16.mxu0 0
    %489 = vmatpush1.bf16.msra.mxu0 %v442
    %490 = vmatprep.subr.bf16.mxu0 0
    %491 = vmatpush1.bf16.msra.mxu0 %v443
    %492 = vmatprep.mubr.bf16.mxu0 %v301
    %493 = vmatmul.mubr.bf16.gmra.mrb[0].mxu0 %v300
    %v494 = vpop.f32.mrb[0].mxu0
    %v495 = vadd.f32 0.0, %v494
    %v496 = vpop.f32.mrb[0].mxu0
    %v497 = vpop.f32.mrb[0].mxu0
    %v498 = vadd.f32 0.0, %v497
    %v499 = vpop.f32.mrb[0].mxu0
    %500 = vmatprep.mubr.bf16.mxu0 %v303
    %501 = vmatmul.mubr.bf16.gmra.mrb[0].mxu0 %v302
    %v502 = vpop.f32.mrb[0].mxu0
    %v503 = vadd.f32 0.0, %v502
    %v504 = vpop.f32.mrb[0].mxu0
    %v505 = vpop.f32.mrb[0].mxu0
    %v506 = vadd.f32 0.0, %v505
    %v507 = vpop.f32.mrb[0].mxu0
    %508 = vmatprep.mubr.bf16.mxu0 %v305
    %509 = vmatmul.mubr.bf16.gmra.mrb[0].mxu0 %v304
    %v510 = vpop.f32.mrb[0].mxu0
    %v511 = vadd.f32 0.0, %v510
    %v512 = vpop.f32.mrb[0].mxu0
    %v513 = vpop.f32.mrb[0].mxu0
    %v514 = vadd.f32 0.0, %v513
    %v515 = vpop.f32.mrb[0].mxu0
    %516 = vmatprep.mubr.bf16.mxu0 %v307
    %517 = vmatmul.mubr.bf16.gmra.mrb[0].mxu0 %v306
    %v518 = vpop.f32.mrb[0].mxu0
    %v519 = vadd.f32 0.0, %v518
    %v520 = vpop.f32.mrb[0].mxu0
    %v521 = vpop.f32.mrb[0].mxu0
    %v522 = vadd.f32 0.0, %v521
    %v523 = vpop.f32.mrb[0].mxu0
    %524 = vmatprep.mubr.bf16.mxu0 %v309
    %525 = vmatmul.mubr.bf16.gmra.mrb[0].mxu0 %v308
    %v526 = vpop.f32.mrb[0].mxu0
    %v527 = vadd.f32 0.0, %v526
    %v528 = vpop.f32.mrb[0].mxu0
    %v529 = vpop.f32.mrb[0].mxu0
    %v530 = vadd.f32 0.0, %v529
    %v531 = vpop.f32.mrb[0].mxu0
    %532 = vmatprep.mubr.bf16.mxu0 %v311
    %533 = vmatmul.mubr.bf16.gmra.mrb[0].mxu0 %v310
    %v534 = vpop.f32.mrb[0].mxu0
    %v535 = vadd.f32 0.0, %v534
    %v536 = vpop.f32.mrb[0].mxu0
    %v537 = vpop.f32.mrb[0].mxu0
    %v538 = vadd.f32 0.0, %v537
    %v539 = vpop.f32.mrb[0].mxu0
    %540 = vmatprep.mubr.bf16.mxu0 %v313
    %541 = vmatmul.mubr.bf16.gmra.mrb[0].mxu0 %v312
    %v542 = vpop.f32.mrb[0].mxu0
    %v543 = vadd.f32 0.0, %v542
    %v544 = vpop.f32.mrb[0].mxu0
    %v545 = vpop.f32.mrb[0].mxu0
    %v546 = vadd.f32 0.0, %v545
    %v547 = vpop.f32.mrb[0].mxu0
    %548 = vmatprep.mubr.bf16.mxu0 %v315
    %549 = vmatmul.mubr.bf16.gmra.mrb[0].mxu0 %v314
    %v550 = vpop.f32.mrb[0].mxu0
    %v551 = vadd.f32 0.0, %v550
    %v552 = vpop.f32.mrb[0].mxu0
    %v553 = vpop.f32.mrb[0].mxu0
    %v554 = vadd.f32 0.0, %v553
    %v555 = vpop.f32.mrb[0].mxu0
    %556 = vmatprep.mubr.bf16.mxu0 %v317
    %557 = vmatmul.mubr.bf16.gmra.mrb[0].mxu0 %v316
    %v558 = vpop.f32.mrb[0].mxu0
    %v559 = vadd.f32 0.0, %v558
    %v560 = vpop.f32.mrb[0].mxu0
    %v561 = vpop.f32.mrb[0].mxu0
    %v562 = vadd.f32 0.0, %v561
    %v563 = vpop.f32.mrb[0].mxu0
    %564 = vmatprep.mubr.bf16.mxu0 %v319
    %565 = vmatmul.mubr.bf16.gmra.mrb[0].mxu0 %v318
    %v566 = vpop.f32.mrb[0].mxu0
    %v567 = vadd.f32 0.0, %v566
    %v568 = vpop.f32.mrb[0].mxu0
    %v569 = vpop.f32.mrb[0].mxu0
    %v570 = vadd.f32 0.0, %v569
    %v571 = vpop.f32.mrb[0].mxu0
    %572 = vmatprep.mubr.bf16.mxu0 %v321
    %573 = vmatmul.mubr.bf16.gmra.mrb[0].mxu0 %v320
    %v574 = vpop.f32.mrb[0].mxu0
    %v575 = vadd.f32 0.0, %v574
    %v576 = vpop.f32.mrb[0].mxu0
    %v577 = vpop.f32.mrb[0].mxu0
    %v578 = vadd.f32 0.0, %v577
    %v579 = vpop.f32.mrb[0].mxu0
    %580 = vmatprep.mubr.bf16.mxu0 %v323
    %581 = vmatmul.mubr.bf16.gmra.mrb[0].mxu0 %v322
    %v582 = vpop.f32.mrb[0].mxu0
    %v583 = vadd.f32 0.0, %v582
    %v584 = vpop.f32.mrb[0].mxu0
    %v585 = vpop.f32.mrb[0].mxu0
    %v586 = vadd.f32 0.0, %v585
    %v587 = vpop.f32.mrb[0].mxu0
    %588 = vmatprep.mubr.bf16.mxu0 %v325
    %589 = vmatmul.mubr.bf16.gmra.mrb[0].mxu0 %v324
    %v590 = vpop.f32.mrb[0].mxu0
    %v591 = vadd.f32 0.0, %v590
    %v592 = vpop.f32.mrb[0].mxu0
    %v593 = vpop.f32.mrb[0].mxu0
    %v594 = vadd.f32 0.0, %v593
    %v595 = vpop.f32.mrb[0].mxu0
    %596 = vmatprep.mubr.bf16.mxu0 %v327
    %597 = vmatmul.mubr.bf16.gmra.mrb[0].mxu0 %v326
    %v598 = vpop.f32.mrb[0].mxu0
    %v599 = vadd.f32 0.0, %v598
    %v600 = vpop.f32.mrb[0].mxu0
    %v601 = vpop.f32.mrb[0].mxu0
    %v602 = vadd.f32 0.0, %v601
    %v603 = vpop.f32.mrb[0].mxu0
    %604 = vmatprep.mubr.bf16.mxu0 %v329
    %605 = vmatmul.mubr.bf16.gmra.mrb[0].mxu0 %v328
    %v606 = vpop.f32.mrb[0].mxu0
    %v607 = vadd.f32 0.0, %v606
    %v608 = vpop.f32.mrb[0].mxu0
    %v609 = vpop.f32.mrb[0].mxu0
    %v610 = vadd.f32 0.0, %v609
    %v611 = vpop.f32.mrb[0].mxu0
    %612 = vmatprep.mubr.bf16.mxu0 %v331
    %613 = vmatmul.mubr.bf16.gmra.mrb[0].mxu0 %v330
    %v614 = vpop.f32.mrb[0].mxu0
    %v615 = vadd.f32 0.0, %v614
    %v616 = vpop.f32.mrb[0].mxu0
    %v617 = vpop.f32.mrb[0].mxu0
    %v618 = vadd.f32 0.0, %v617
    %v619 = vpop.f32.mrb[0].mxu0
    %620 = vdwg.mxu0
    %v621 = vadd.f32 %v108, %v495
    %v622 = vadd.f32 %v109, %v498
    %v623 = vadd.f32 %v110, %v503
    %v624 = vadd.f32 %v111, %v506
    %v625 = vadd.f32 %v112, %v511
    %v626 = vadd.f32 %v113, %v514
    %v627 = vadd.f32 %v114, %v519
    %v628 = vadd.f32 %v115, %v522
    %v629 = vadd.f32 %v116, %v527
    %v630 = vadd.f32 %v117, %v530
    %v631 = vadd.f32 %v118, %v535
    %v632 = vadd.f32 %v119, %v538
    %v633 = vadd.f32 %v120, %v543
    %v634 = vadd.f32 %v121, %v546
    %v635 = vadd.f32 %v122, %v551
    %v636 = vadd.f32 %v123, %v554
    %v637 = vadd.f32 %v124, %v559
    %v638 = vadd.f32 %v125, %v562
    %v639 = vadd.f32 %v126, %v567
    %v640 = vadd.f32 %v127, %v570
    %v641 = vadd.f32 %v128, %v575
    %v642 = vadd.f32 %v129, %v578
    %v643 = vadd.f32 %v130, %v583
    %v644 = vadd.f32 %v131, %v586
    %v645 = vadd.f32 %v132, %v591
    %v646 = vadd.f32 %v133, %v594
    %v647 = vadd.f32 %v134, %v599
    %v648 = vadd.f32 %v135, %v602
    %v649 = vadd.f32 %v136, %v607
    %v650 = vadd.f32 %v137, %v610
    %v651 = vadd.f32 %v138, %v615
    %v652 = vadd.f32 %v139, %v618
    %653 = vst [vmem:[#allocation2] sm:$0xff] %v621
    %654 = vst [vmem:[#allocation2 + $0x8] sm:$0xff] %v622
    %655 = vst [vmem:[#allocation2 + $0x10] sm:$0xff] %v623
    %656 = vst [vmem:[#allocation2 + $0x18] sm:$0xff] %v624
    %657 = vst [vmem:[#allocation2 + $0x20] sm:$0xff] %v625
    %658 = vst [vmem:[#allocation2 + $0x28] sm:$0xff] %v626
    %659 = vst [vmem:[#allocation2 + $0x30] sm:$0xff] %v627
    %660 = vst [vmem:[#allocation2 + $0x38] sm:$0xff] %v628
    %661 = vst [vmem:[#allocation2 + $0x40] sm:$0xff] %v629
    %662 = vst [vmem:[#allocation2 + $0x48] sm:$0xff] %v630
    %663 = vst [vmem:[#allocation2 + $0x50] sm:$0xff] %v631
    %664 = vst [vmem:[#allocation2 + $0x58] sm:$0xff] %v632
    %665 = vst [vmem:[#allocation2 + $0x60] sm:$0xff] %v633
    %666 = vst [vmem:[#allocation2 + $0x68] sm:$0xff] %v634
    %667 = vst [vmem:[#allocation2 + $0x70] sm:$0xff] %v635
    %668 = vst [vmem:[#allocation2 + $0x78] sm:$0xff] %v636
    %669 = vst [vmem:[#allocation2 + $0x80] sm:$0xff] %v637
    %670 = vst [vmem:[#allocation2 + $0x88] sm:$0xff] %v638
    %671 = vst [vmem:[#allocation2 + $0x90] sm:$0xff] %v639
    %672 = vst [vmem:[#allocation2 + $0x98] sm:$0xff] %v640
    %673 = vst [vmem:[#allocation2 + $0xa0] sm:$0xff] %v641
    %674 = vst [vmem:[#allocation2 + $0xa8] sm:$0xff] %v642
    %675 = vst [vmem:[#allocation2 + $0xb0] sm:$0xff] %v643
    %676 = vst [vmem:[#allocation2 + $0xb8] sm:$0xff] %v644
    %677 = vst [vmem:[#allocation2 + $0xc0] sm:$0xff] %v645
    %678 = vst [vmem:[#allocation2 + $0xc8] sm:$0xff] %v646
    %679 = vst [vmem:[#allocation2 + $0xd0] sm:$0xff] %v647
    %680 = vst [vmem:[#allocation2 + $0xd8] sm:$0xff] %v648
    %681 = vst [vmem:[#allocation2 + $0xe0] sm:$0xff] %v649
    %682 = vst [vmem:[#allocation2 + $0xe8] sm:$0xff] %v650
    %683 = vst [vmem:[#allocation2 + $0xf0] sm:$0xff] %v651
    %684 = vst [vmem:[#allocation2 + $0xf8] sm:$0xff] %v652
    // Predicated region
    $region38: #{stock_gnn_forward.3} parent=1 // pred_check
      %p685 = pneg %p72
    $region39: #{stock_gnn_forward.3} parent=1 // pred_check_branch
      %687 = sbr.rel (%p685) target = $region41
    $region40: #{stock_gnn_forward.3} parent=1 // pred_region
      %v688 = vld [vmem:[#allocation2] sm:$0xff]
      %v689 = vld [vmem:[#allocation2 + $0x8] sm:$0xff]
      %v690 = vld [vmem:[#allocation2 + $0x10] sm:$0xff]
      %v691 = vld [vmem:[#allocation2 + $0x18] sm:$0xff]
      %v692 = vld [vmem:[#allocation2 + $0x20] sm:$0xff]
      %v693 = vld [vmem:[#allocation2 + $0x28] sm:$0xff]
      %v694 = vld [vmem:[#allocation2 + $0x30] sm:$0xff]
      %v695 = vld [vmem:[#allocation2 + $0x38] sm:$0xff]
      %v696 = vld [vmem:[#allocation2 + $0x40] sm:$0xff]
      %v697 = vld [vmem:[#allocation2 + $0x48] sm:$0xff]
      %v698 = vld [vmem:[#allocation2 + $0x50] sm:$0xff]
      %v699 = vld [vmem:[#allocation2 + $0x58] sm:$0xff]
      %v700 = vld [vmem:[#allocation2 + $0x60] sm:$0xff]
      %v701 = vld [vmem:[#allocation2 + $0x68] sm:$0xff]
      %v702 = vld [vmem:[#allocation2 + $0x70] sm:$0xff]
      %v703 = vld [vmem:[#allocation2 + $0x78] sm:$0xff]
      %v704 = vld [vmem:[#allocation2 + $0x80] sm:$0xff]
      %v705 = vld [vmem:[#allocation2 + $0x88] sm:$0xff]
      %v706 = vld [vmem:[#allocation2 + $0x90] sm:$0xff]
      %v707 = vld [vmem:[#allocation2 + $0x98] sm:$0xff]
      %v708 = vld [vmem:[#allocation2 + $0xa0] sm:$0xff]
      %v709 = vld [vmem:[#allocation2 + $0xa8] sm:$0xff]
      %v710 = vld [vmem:[#allocation2 + $0xb0] sm:$0xff]
      %v711 = vld [vmem:[#allocation2 + $0xb8] sm:$0xff]
      %v712 = vld [vmem:[#allocation2 + $0xc0] sm:$0xff]
      %v713 = vld [vmem:[#allocation2 + $0xc8] sm:$0xff]
      %v714 = vld [vmem:[#allocation2 + $0xd0] sm:$0xff]
      %v715 = vld [vmem:[#allocation2 + $0xd8] sm:$0xff]
      %v716 = vld [vmem:[#allocation2 + $0xe0] sm:$0xff]
      %v717 = vld [vmem:[#allocation2 + $0xe8] sm:$0xff]
      %v718 = vld [vmem:[#allocation2 + $0xf0] sm:$0xff]
      %v719 = vld [vmem:[#allocation2 + $0xf8] sm:$0xff]
      %v720 = vld [vmem:[#allocation8] sm:$0xff]
      %v721 = vld [vmem:[#allocation8 + $0x8] sm:$0xff]
      %v722 = vld [vmem:[#allocation8 + $0x10] sm:$0xff]
      %v723 = vld [vmem:[#allocation8 + $0x18] sm:$0xff]
      %v724 = vld [vmem:[#allocation8 + $0x20] sm:$0xff]
      %v725 = vld [vmem:[#allocation8 + $0x28] sm:$0xff]
      %v726 = vld [vmem:[#allocation8 + $0x30] sm:$0xff]
      %v727 = vld [vmem:[#allocation8 + $0x38] sm:$0xff]
      %v728 = vld [vmem:[#allocation8 + $0x40] sm:$0xff]
      %v729 = vld [vmem:[#allocation8 + $0x48] sm:$0xff]
      %v730 = vld [vmem:[#allocation8 + $0x50] sm:$0xff]
      %v731 = vld [vmem:[#allocation8 + $0x58] sm:$0xff]
      %v732 = vld [vmem:[#allocation8 + $0x60] sm:$0xff]
      %v733 = vld [vmem:[#allocation8 + $0x68] sm:$0xff]
      %v734 = vld [vmem:[#allocation8 + $0x70] sm:$0xff]
      %v735 = vld [vmem:[#allocation8 + $0x78] sm:$0xff]
      %v736 = vld [vmem:[#allocation9] sm:$0x1]
      %v738 = vlaneseq
      %v739 = vshrl.u32 %v738, 7
      %v740 = vsub.s32 0, %v739
      %v741 = vrot.slane %v736, %v740
      %743 = vmatprep.subr.mxu0 0.0
      %744 = vmatpush1.msra.mxu0 %v720
      %745 = vmatprep.subr.mxu0 0.0
      %746 = vmatpush1.msra.mxu0 %v721
      %747 = vmatprep.subr.mxu0 0.0
      %748 = vmatpush1.msra.mxu0 %v722
      %749 = vmatprep.subr.mxu0 0.0
      %750 = vmatpush1.msra.mxu0 %v723
      %751 = vmatprep.subr.mxu0 0.0
      %752 = vmatpush1.msra.mxu0 %v724
      %753 = vmatprep.subr.mxu0 0.0
      %754 = vmatpush1.msra.mxu0 %v725
      %755 = vmatprep.subr.mxu0 0.0
      %756 = vmatpush1.msra.mxu0 %v726
      %757 = vmatprep.subr.mxu0 0.0
      %758 = vmatpush1.msra.mxu0 %v727
      %759 = vmatprep.subr.mxu0 0.0
      %760 = vmatpush1.msra.mxu0 %v728
      %761 = vmatprep.subr.mxu0 0.0
      %762 = vmatpush1.msra.mxu0 %v729
      %763 = vmatprep.subr.mxu0 0.0
      %764 = vmatpush1.msra.mxu0 %v730
      %765 = vmatprep.subr.mxu0 0.0
      %766 = vmatpush1.msra.mxu0 %v731
      %767 = vmatprep.subr.mxu0 0.0
      %768 = vmatpush1.msra.mxu0 %v732
      %769 = vmatprep.subr.mxu0 0.0
      %770 = vmatpush1.msra.mxu0 %v733
      %771 = vmatprep.subr.mxu0 0.0
      %772 = vmatpush1.msra.mxu0 %v734
      %773 = vmatprep.subr.mxu0 0.0
      %774 = vmatpush1.msra.mxu0 %v735
      %775 = vmatprep.subr.mxu0 0.0
      %776 = vmatpush1.msra.mxu0 0.0
      %777 = vmatprep.subr.mxu0 0.0
      %778 = vmatpush1.msra.mxu0 0.0
      %779 = vmatprep.subr.mxu0 0.0
      %780 = vmatpush1.msra.mxu0 0.0
      %781 = vmatprep.subr.mxu0 0.0
      %782 = vmatpush1.msra.mxu0 0.0
      %783 = vmatprep.subr.mxu0 0.0
      %784 = vmatpush1.msra.mxu0 0.0
      %785 = vmatprep.subr.mxu0 0.0
      %786 = vmatpush1.msra.mxu0 0.0
      %787 = vmatprep.subr.mxu0 0.0
      %788 = vmatpush1.msra.mxu0 0.0
      %789 = vmatprep.subr.mxu0 0.0
      %790 = vmatpush1.msra.mxu0 0.0
      %791 = vmatprep.subr.mxu0 0.0
      %792 = vmatpush1.msra.mxu0 0.0
      %793 = vmatprep.subr.mxu0 0.0
      %794 = vmatpush1.msra.mxu0 0.0
      %795 = vmatprep.subr.mxu0 0.0
      %796 = vmatpush1.msra.mxu0 0.0
      %797 = vmatprep.subr.mxu0 0.0
      %798 = vmatpush1.msra.mxu0 0.0
      %799 = vmatprep.subr.mxu0 0.0
      %800 = vmatpush1.msra.mxu0 0.0
      %801 = vmatprep.subr.mxu0 0.0
      %802 = vmatpush1.msra.mxu0 0.0
      %803 = vmatprep.subr.mxu0 0.0
      %804 = vmatpush1.msra.mxu0 0.0
      %805 = vmatprep.subr.mxu0 0.0
      %806 = vmatpush1.msra.mxu0 0.0
      %807 = vmatprep.mubr.f32.mxu0 0.0
      %808 = vmatmul.mubr.f32.gmra.mrb[0].mxu0 %v688
      %v809 = vpop.f32.mrb[0].mxu0
      %v810 = vadd.f32 %v741, %v809
      %v811 = vpop.f32.mrb[0].mxu0
      %812 = vmatprep.mubr.f32.mxu0 0.0
      %813 = vmatmul.mubr.f32.gmra.mrb[0].mxu0 %v689
      %v814 = vpop.f32.mrb[0].mxu0
      %v815 = vadd.f32 %v741, %v814
      %v816 = vpop.f32.mrb[0].mxu0
      %817 = vmatprep.mubr.f32.mxu0 0.0
      %818 = vmatmul.mubr.f32.gmra.mrb[0].mxu0 %v690
      %v819 = vpop.f32.mrb[0].mxu0
      %v820 = vadd.f32 %v741, %v819
      %v821 = vpop.f32.mrb[0].mxu0
      %822 = vmatprep.mubr.f32.mxu0 0.0
      %823 = vmatmul.mubr.f32.gmra.mrb[0].mxu0 %v691
      %v824 = vpop.f32.mrb[0].mxu0
      %v825 = vadd.f32 %v741, %v824
      %v826 = vpop.f32.mrb[0].mxu0
      %827 = vmatprep.mubr.f32.mxu0 0.0
      %828 = vmatmul.mubr.f32.gmra.mrb[0].mxu0 %v692
      %v829 = vpop.f32.mrb[0].mxu0
      %v830 = vadd.f32 %v741, %v829
      %v831 = vpop.f32.mrb[0].mxu0
      %832 = vmatprep.mubr.f32.mxu0 0.0
      %833 = vmatmul.mubr.f32.gmra.mrb[0].mxu0 %v693
      %v834 = vpop.f32.mrb[0].mxu0
      %v835 = vadd.f32 %v741, %v834
      %v836 = vpop.f32.mrb[0].mxu0
      %837 = vmatprep.mubr.f32.mxu0 0.0
      %838 = vmatmul.mubr.f32.gmra.mrb[0].mxu0 %v694
      %v839 = vpop.f32.mrb[0].mxu0
      %v840 = vadd.f32 %v741, %v839
      %v841 = vpop.f32.mrb[0].mxu0
      %842 = vmatprep.mubr.f32.mxu0 0.0
      %843 = vmatmul.mubr.f32.gmra.mrb[0].mxu0 %v695
      %v844 = vpop.f32.mrb[0].mxu0
      %v845 = vadd.f32 %v741, %v844
      %v846 = vpop.f32.mrb[0].mxu0
      %847 = vmatprep.mubr.f32.mxu0 0.0
      %848 = vmatmul.mubr.f32.gmra.mrb[0].mxu0 %v696
      %v849 = vpop.f32.mrb[0].mxu0
      %v850 = vadd.f32 %v741, %v849
      %v851 = vpop.f32.mrb[0].mxu0
      %852 = vmatprep.mubr.f32.mxu0 0.0
      %853 = vmatmul.mubr.f32.gmra.mrb[0].mxu0 %v697
      %v854 = vpop.f32.mrb[0].mxu0
      %v855 = vadd.f32 %v741, %v854
      %v856 = vpop.f32.mrb[0].mxu0
      %857 = vmatprep.mubr.f32.mxu0 0.0
      %858 = vmatmul.mubr.f32.gmra.mrb[0].mxu0 %v698
      %v859 = vpop.f32.mrb[0].mxu0
      %v860 = vadd.f32 %v741, %v859
      %v861 = vpop.f32.mrb[0].mxu0
      %862 = vmatprep.mubr.f32.mxu0 0.0
      %863 = vmatmul.mubr.f32.gmra.mrb[0].mxu0 %v699
      %v864 = vpop.f32.mrb[0].mxu0
      %v865 = vadd.f32 %v741, %v864
      %v866 = vpop.f32.mrb[0].mxu0
      %867 = vmatprep.mubr.f32.mxu0 0.0
      %868 = vmatmul.mubr.f32.gmra.mrb[0].mxu0 %v700
      %v869 = vpop.f32.mrb[0].mxu0
      %v870 = vadd.f32 %v741, %v869
      %v871 = vpop.f32.mrb[0].mxu0
      %872 = vmatprep.mubr.f32.mxu0 0.0
      %873 = vmatmul.mubr.f32.gmra.mrb[0].mxu0 %v701
      %v874 = vpop.f32.mrb[0].mxu0
      %v875 = vadd.f32 %v741, %v874
      %v876 = vpop.f32.mrb[0].mxu0
      %877 = vmatprep.mubr.f32.mxu0 0.0
      %878 = vmatmul.mubr.f32.gmra.mrb[0].mxu0 %v702
      %v879 = vpop.f32.mrb[0].mxu0
      %v880 = vadd.f32 %v741, %v879
      %v881 = vpop.f32.mrb[0].mxu0
      %882 = vmatprep.mubr.f32.mxu0 0.0
      %883 = vmatmul.mubr.f32.gmra.mrb[0].mxu0 %v703
      %v884 = vpop.f32.mrb[0].mxu0
      %v885 = vadd.f32 %v741, %v884
      %v886 = vpop.f32.mrb[0].mxu0
      %887 = vmatprep.mubr.f32.mxu0 0.0
      %888 = vmatmul.mubr.f32.gmra.mrb[0].mxu0 %v704
      %v889 = vpop.f32.mrb[0].mxu0
      %v890 = vadd.f32 %v741, %v889
      %v891 = vpop.f32.mrb[0].mxu0
      %892 = vmatprep.mubr.f32.mxu0 0.0
      %893 = vmatmul.mubr.f32.gmra.mrb[0].mxu0 %v705
      %v894 = vpop.f32.mrb[0].mxu0
      %v895 = vadd.f32 %v741, %v894
      %v896 = vpop.f32.mrb[0].mxu0
      %897 = vmatprep.mubr.f32.mxu0 0.0
      %898 = vmatmul.mubr.f32.gmra.mrb[0].mxu0 %v706
      %v899 = vpop.f32.mrb[0].mxu0
      %v900 = vadd.f32 %v741, %v899
      %v901 = vpop.f32.mrb[0].mxu0
      %902 = vmatprep.mubr.f32.mxu0 0.0
      %903 = vmatmul.mubr.f32.gmra.mrb[0].mxu0 %v707
      %v904 = vpop.f32.mrb[0].mxu0
      %v905 = vadd.f32 %v741, %v904
      %v906 = vpop.f32.mrb[0].mxu0
      %907 = vmatprep.mubr.f32.mxu0 0.0
      %908 = vmatmul.mubr.f32.gmra.mrb[0].mxu0 %v708
      %v909 = vpop.f32.mrb[0].mxu0
      %v910 = vadd.f32 %v741, %v909
      %v911 = vpop.f32.mrb[0].mxu0
      %912 = vmatprep.mubr.f32.mxu0 0.0
      %913 = vmatmul.mubr.f32.gmra.mrb[0].mxu0 %v709
      %v914 = vpop.f32.mrb[0].mxu0
      %v915 = vadd.f32 %v741, %v914
      %v916 = vpop.f32.mrb[0].mxu0
      %917 = vmatprep.mubr.f32.mxu0 0.0
      %918 = vmatmul.mubr.f32.gmra.mrb[0].mxu0 %v710
      %v919 = vpop.f32.mrb[0].mxu0
      %v920 = vadd.f32 %v741, %v919
      %v921 = vpop.f32.mrb[0].mxu0
      %922 = vmatprep.mubr.f32.mxu0 0.0
      %923 = vmatmul.mubr.f32.gmra.mrb[0].mxu0 %v711
      %v924 = vpop.f32.mrb[0].mxu0
      %v925 = vadd.f32 %v741, %v924
      %v926 = vpop.f32.mrb[0].mxu0
      %927 = vmatprep.mubr.f32.mxu0 0.0
      %928 = vmatmul.mubr.f32.gmra.mrb[0].mxu0 %v712
      %v929 = vpop.f32.mrb[0].mxu0
      %v930 = vadd.f32 %v741, %v929
      %v931 = vpop.f32.mrb[0].mxu0
      %932 = vmatprep.mubr.f32.mxu0 0.0
      %933 = vmatmul.mubr.f32.gmra.mrb[0].mxu0 %v713
      %v934 = vpop.f32.mrb[0].mxu0
      %v935 = vadd.f32 %v741, %v934
      %v936 = vpop.f32.mrb[0].mxu0
      %937 = vmatprep.mubr.f32.mxu0 0.0
      %938 = vmatmul.mubr.f32.gmra.mrb[0].mxu0 %v714
      %v939 = vpop.f32.mrb[0].mxu0
      %v940 = vadd.f32 %v741, %v939
      %v941 = vpop.f32.mrb[0].mxu0
      %942 = vmatprep.mubr.f32.mxu0 0.0
      %943 = vmatmul.mubr.f32.gmra.mrb[0].mxu0 %v715
      %v944 = vpop.f32.mrb[0].mxu0
      %v945 = vadd.f32 %v741, %v944
      %v946 = vpop.f32.mrb[0].mxu0
      %947 = vmatprep.mubr.f32.mxu0 0.0
      %948 = vmatmul.mubr.f32.gmra.mrb[0].mxu0 %v716
      %v949 = vpop.f32.mrb[0].mxu0
      %v950 = vadd.f32 %v741, %v949
      %v951 = vpop.f32.mrb[0].mxu0
      %952 = vmatprep.mubr.f32.mxu0 0.0
      %953 = vmatmul.mubr.f32.gmra.mrb[0].mxu0 %v717
      %v954 = vpop.f32.mrb[0].mxu0
      %v955 = vadd.f32 %v741, %v954
      %v956 = vpop.f32.mrb[0].mxu0
      %957 = vmatprep.mubr.f32.mxu0 0.0
      %958 = vmatmul.mubr.f32.gmra.mrb[0].mxu0 %v718
      %v959 = vpop.f32.mrb[0].mxu0
      %v960 = vadd.f32 %v741, %v959
      %v961 = vpop.f32.mrb[0].mxu0
      %962 = vmatprep.mubr.f32.mxu0 0.0
      %963 = vmatmul.mubr.f32.gmra.mrb[0].mxu0 %v719
      %v964 = vpop.f32.mrb[0].mxu0
      %v965 = vadd.f32 %v741, %v964
      %v966 = vpop.f32.mrb[0].mxu0
      %967 = vdwg.mxu0
      %968 = vst [vmem:[#allocation11] sm:$0xff] %v810
      %969 = vst [vmem:[#allocation11 + $0x8] sm:$0xff] %v815
      %970 = vst [vmem:[#allocation11 + $0x10] sm:$0xff] %v820
      %971 = vst [vmem:[#allocation11 + $0x18] sm:$0xff] %v825
      %972 = vst [vmem:[#allocation11 + $0x20] sm:$0xff] %v830
      %973 = vst [vmem:[#allocation11 + $0x28] sm:$0xff] %v835
      %974 = vst [vmem:[#allocation11 + $0x30] sm:$0xff] %v840
      %975 = vst [vmem:[#allocation11 + $0x38] sm:$0xff] %v845
      %976 = vst [vmem:[#allocation11 + $0x40] sm:$0xff] %v850
      %977 = vst [vmem:[#allocation11 + $0x48] sm:$0xff] %v855
      %978 = vst [vmem:[#allocation11 + $0x50] sm:$0xff] %v860
      %979 = vst [vmem:[#allocation11 + $0x58] sm:$0xff] %v865
      %980 = vst [vmem:[#allocation11 + $0x60] sm:$0xff] %v870
      %981 = vst [vmem:[#allocation11 + $0x68] sm:$0xff] %v875
      %982 = vst [vmem:[#allocation11 + $0x70] sm:$0xff] %v880
      %983 = vst [vmem:[#allocation11 + $0x78] sm:$0xff] %v885
      %984 = vst [vmem:[#allocation11 + $0x80] sm:$0xff] %v890
      %985 = vst [vmem:[#allocation11 + $0x88] sm:$0xff] %v895
      %986 = vst [vmem:[#allocation11 + $0x90] sm:$0xff] %v900
      %987 = vst [vmem:[#allocation11 + $0x98] sm:$0xff] %v905
      %988 = vst [vmem:[#allocation11 + $0xa0] sm:$0xff] %v910
      %989 = vst [vmem:[#allocation11 + $0xa8] sm:$0xff] %v915
      %990 = vst [vmem:[#allocation11 + $0xb0] sm:$0xff] %v920
      %991 = vst [vmem:[#allocation11 + $0xb8] sm:$0xff] %v925
      %992 = vst [vmem:[#allocation11 + $0xc0] sm:$0xff] %v930
      %993 = vst [vmem:[#allocation11 + $0xc8] sm:$0xff] %v935
      %994 = vst [vmem:[#allocation11 + $0xd0] sm:$0xff] %v940
      %995 = vst [vmem:[#allocation11 + $0xd8] sm:$0xff] %v945
      %996 = vst [vmem:[#allocation11 + $0xe0] sm:$0xff] %v950
      %997 = vst [vmem:[#allocation11 + $0xe8] sm:$0xff] %v955
      %998 = vst [vmem:[#allocation11 + $0xf0] sm:$0xff] %v960
      %999 = vst [vmem:[#allocation11 + $0xf8] sm:$0xff] %v965
    $region41: #{stock_gnn_forward.3} parent=1 // pred_fallthru
      _
    // Predicated region
    $region42: #{stock_gnn_forward.3} parent=1 // pred_check
      _
    $region43: #{stock_gnn_forward.3} parent=1 // pred_check_branch
      %1001 = sbr.rel (0) target = $region45
    $region44: #{stock_gnn_forward.3} parent=1 // pred_region
      %s1003 = ssub.s32 4096, 4096
      %1004 = vsyncadd [#allocation5], %s1003
      %s1005 = sshll.u32 [#allocation11], 4
      %s1006 = int_to_ptr.vmem [resolvable:$true] %s1005
      %1011 = dma.vmem_to_hbm [thread:$0]  %s1006, 4096, %s4, [#allocation5], 128, 128, 8
    $region45: #{stock_gnn_forward.3} parent=1 // pred_fallthru
      _
    // Predicated region
    $region46: #{stock_gnn_forward.3} parent=1 // pred_check
      _
    $region47: #{stock_gnn_forward.3} parent=1 // pred_check_branch
      %1013 = sbr.rel (0) target = $region49
    $region48: #{stock_gnn_forward.3} parent=1 // pred_region
      %1014 = dma.done [#allocation5], 4096
    $region49: #{stock_gnn_forward.3} parent=1 // pred_fallthru
      _
    %1015 = vsyncpa [#allocation4], 1
    %1016 = vsyncpa [#allocation7], 1
    %1017 = vsyncpa [#allocation10], 1
    %1018 = vsyncpa [#allocation5], 1

// kernel: stock_gnn_forward.2
$region0: #{stock_gnn_forward.2}
  #allocation0 [shape = 'u32[]', space=smem, size = 0x4, offset = 0x4, fixed_abs, tag = 'smem constant byte address 0x4 - core index']
  #allocation1 [shape = 'u32[144,128]{1,0:T(1,128)}', space=vmem, size = 0x12000, scoped, tag = 'internal scratch']
  #allocation2 [shape = 'f32[256,128]{1,0:T(8,128)}', space=vmem, size = 0x20000, scoped, tag = 'scratch operand']
  %s0 = inlined_call_operand.hbm [shape: bf16[256,256], index: 0, kind: input, shape index: {}]
  %s1 = inlined_call_operand.hbm [shape: bf16[256,128], index: 1, kind: input, shape index: {}]
  %s2 = inlined_call_operand.hbm [shape: f32[1,128], index: 2, kind: input, shape index: {}]
  %s3 = inlined_call_operand.hbm [shape: bf16[256,128], index: 3, kind: output, shape index: {}]
  %s4 = sld [smem:[#allocation0]]
  $region42: #{stock_gnn_forward.2} parent=0
    _
  %s6 = ssub.s32 1, %s4
  %s7 = scalar_select 0, %s6, %s4
  $region1: #{stock_gnn_forward.2} parent=0
    #allocation3 [shape = 'u8[131072]{0}', space=vmem, size = 0x20000, scoped, tag = 'input window, operand 0, single buffered']
    #allocation4 [shape = 's32[1]{0}', space=sflag, size = 0x4, scoped, tag = 'scoped memory for stock_gnn_forward.2']
    #allocation5 [shape = 's32[1]{0}', space=sflag, size = 0x4, scoped, tag = 'scoped memory for stock_gnn_forward.2']
    #allocation6 [shape = 'u8[65536]{0}', space=vmem, size = 0x10000, scoped, tag = 'input window, operand 1, single buffered']
    #allocation7 [shape = 's32[1]{0}', space=sflag, size = 0x4, scoped, tag = 'scoped memory for stock_gnn_forward.2']
    #allocation8 [shape = 'u8[512]{0}', space=vmem, size = 0x400, scoped, tag = 'input window, operand 2, single buffered']
    #allocation9 [shape = 'u8[65536]{0}', space=vmem, size = 0x10000, scoped, tag = 'output window, operand 0, single buffered']
    %8 = vsyncpa [#allocation4], 0
    %9 = vsyncpa [#allocation7], 0
    %10 = vsyncpa [#allocation5], 0
    // Predicated region
    $region2: #{stock_gnn_forward.2} parent=1 // pred_check
      _
    $region3: #{stock_gnn_forward.2} parent=1 // pred_check_branch
      %12 = sbr.rel (0) target = $region5
    $region4: #{stock_gnn_forward.2} parent=1 // pred_region
      %s14 = ssub.s32 4096, 4096
      %15 = vsyncadd [#allocation4], %s14
      %s16 = sshll.u32 [#allocation3], 4
      %s17 = int_to_ptr.vmem [resolvable:$true] %s16
      %22 = dma.hbm_to_vmem [thread:$0]  %s0, 4096, %s17, [#allocation4], 128, 128, 8
    $region5: #{stock_gnn_forward.2} parent=1 // pred_fallthru
      _
    // Predicated region
    $region6: #{stock_gnn_forward.2} parent=1 // pred_check
      _
    $region7: #{stock_gnn_forward.2} parent=1 // pred_check_branch
      %24 = sbr.rel (0) target = $region9
    $region8: #{stock_gnn_forward.2} parent=1 // pred_region
      %s26 = ssub.s32 2048, 2048
      %27 = vsyncadd [#allocation7], %s26
      %s28 = sshll.u32 [#allocation6], 4
      %s29 = int_to_ptr.vmem [resolvable:$true] %s28
      %34 = dma.hbm_to_vmem [thread:$0]  %s1, 2048, %s29, [#allocation7], 64, 64, 4
    $region9: #{stock_gnn_forward.2} parent=1 // pred_fallthru
      _
    // Predicated region
    $region10: #{stock_gnn_forward.2} parent=1 // pred_check
      _
    $region11: #{stock_gnn_forward.2} parent=1 // pred_check_branch
      %36 = sbr.rel (0) target = $region13
    $region12: #{stock_gnn_forward.2} parent=1 // pred_region
      %s38 = ssub.s32 16, 16
      %39 = vsyncadd [#allocation7], %s38
      %s41 = sshll.u32 [#allocation8], 4
      %s42 = int_to_ptr.vmem [resolvable:$true] %s41
      %44 = dma.hbm_to_vmem [thread:$0]  %s2, 16, %s42, [#allocation7]
    $region13: #{stock_gnn_forward.2} parent=1 // pred_fallthru
      _
    // Predicated region
    $region14: #{stock_gnn_forward.2} parent=1 // pred_check
      _
    $region15: #{stock_gnn_forward.2} parent=1 // pred_check_branch
      %46 = sbr.rel (0) target = $region17
    $region16: #{stock_gnn_forward.2} parent=1 // pred_region
      %47 = dma.done [#allocation4], 4096
    $region17: #{stock_gnn_forward.2} parent=1 // pred_fallthru
      _
    // Predicated region
    $region18: #{stock_gnn_forward.2} parent=1 // pred_check
      _
    $region19: #{stock_gnn_forward.2} parent=1 // pred_check_branch
      %49 = sbr.rel (0) target = $region21
    $region20: #{stock_gnn_forward.2} parent=1 // pred_region
      %50 = dma.done [#allocation7], 2048
    $region21: #{stock_gnn_forward.2} parent=1 // pred_fallthru
      _
    // Predicated region
    $region22: #{stock_gnn_forward.2} parent=1 // pred_check
      _
    $region23: #{stock_gnn_forward.2} parent=1 // pred_check_branch
      %52 = sbr.rel (0) target = $region25
    $region24: #{stock_gnn_forward.2} parent=1 // pred_region
      %53 = dma.done [#allocation7], 16
    $region25: #{stock_gnn_forward.2} parent=1 // pred_fallthru
      _
    %p55 = scmp.eq.s32.totalorder 0, 0
    // Predicated region
    $region26: #{stock_gnn_forward.2} parent=1 // pred_check
      %p56 = pneg %p55
    $region27: #{stock_gnn_forward.2} parent=1 // pred_check_branch
      %58 = sbr.rel (%p56) target = $region29
    $region28: #{stock_gnn_forward.2} parent=1 // pred_region
      %59 = vst [vmem:[#allocation2] sm:$0xff] 0.0
      %60 = vst [vmem:[#allocation2 + $0x8] sm:$0xff] 0.0
      %61 = vst [vmem:[#allocation2 + $0x10] sm:$0xff] 0.0
      %62 = vst [vmem:[#allocation2 + $0x18] sm:$0xff] 0.0
      %63 = vst [vmem:[#allocation2 + $0x20] sm:$0xff] 0.0
      %64 = vst [vmem:[#allocation2 + $0x28] sm:$0xff] 0.0
      %65 = vst [vmem:[#allocation2 + $0x30] sm:$0xff] 0.0
      %66 = vst [vmem:[#allocation2 + $0x38] sm:$0xff] 0.0
      %67 = vst [vmem:[#allocation2 + $0x40] sm:$0xff] 0.0
      %68 = vst [vmem:[#allocation2 + $0x48] sm:$0xff] 0.0
      %69 = vst [vmem:[#allocation2 + $0x50] sm:$0xff] 0.0
      %70 = vst [vmem:[#allocation2 + $0x58] sm:$0xff] 0.0
      %71 = vst [vmem:[#allocation2 + $0x60] sm:$0xff] 0.0
      %72 = vst [vmem:[#allocation2 + $0x68] sm:$0xff] 0.0
      %73 = vst [vmem:[#allocation2 + $0x70] sm:$0xff] 0.0
      %74 = vst [vmem:[#allocation2 + $0x78] sm:$0xff] 0.0
      %75 = vst [vmem:[#allocation2 + $0x80] sm:$0xff] 0.0
      %76 = vst [vmem:[#allocation2 + $0x88] sm:$0xff] 0.0
      %77 = vst [vmem:[#allocation2 + $0x90] sm:$0xff] 0.0
      %78 = vst [vmem:[#allocation2 + $0x98] sm:$0xff] 0.0
      %79 = vst [vmem:[#allocation2 + $0xa0] sm:$0xff] 0.0
      %80 = vst [vmem:[#allocation2 + $0xa8] sm:$0xff] 0.0
      %81 = vst [vmem:[#allocation2 + $0xb0] sm:$0xff] 0.0
      %82 = vst [vmem:[#allocation2 + $0xb8] sm:$0xff] 0.0
      %83 = vst [vmem:[#allocation2 + $0xc0] sm:$0xff] 0.0
      %84 = vst [vmem:[#allocation2 + $0xc8] sm:$0xff] 0.0
      %85 = vst [vmem:[#allocation2 + $0xd0] sm:$0xff] 0.0
      %86 = vst [vmem:[#allocation2 + $0xd8] sm:$0xff] 0.0
      %87 = vst [vmem:[#allocation2 + $0xe0] sm:$0xff] 0.0
      %88 = vst [vmem:[#allocation2 + $0xe8] sm:$0xff] 0.0
      %89 = vst [vmem:[#allocation2 + $0xf0] sm:$0xff] 0.0
      %90 = vst [vmem:[#allocation2 + $0xf8] sm:$0xff] 0.0
    $region29: #{stock_gnn_forward.2} parent=1 // pred_fallthru
      _
    %v91 = vld [vmem:[#allocation2] sm:$0xff]
    %v92 = vld [vmem:[#allocation2 + $0x8] sm:$0xff]
    %v93 = vld [vmem:[#allocation2 + $0x10] sm:$0xff]
    %v94 = vld [vmem:[#allocation2 + $0x18] sm:$0xff]
    %v95 = vld [vmem:[#allocation2 + $0x20] sm:$0xff]
    %v96 = vld [vmem:[#allocation2 + $0x28] sm:$0xff]
    %v97 = vld [vmem:[#allocation2 + $0x30] sm:$0xff]
    %v98 = vld [vmem:[#allocation2 + $0x38] sm:$0xff]
    %v99 = vld [vmem:[#allocation2 + $0x40] sm:$0xff]
    %v100 = vld [vmem:[#allocation2 + $0x48] sm:$0xff]
    %v101 = vld [vmem:[#allocation2 + $0x50] sm:$0xff]
    %v102 = vld [vmem:[#allocation2 + $0x58] sm:$0xff]
    %v103 = vld [vmem:[#allocation2 + $0x60] sm:$0xff]
    %v104 = vld [vmem:[#allocation2 + $0x68] sm:$0xff]
    %v105 = vld [vmem:[#allocation2 + $0x70] sm:$0xff]
    %v106 = vld [vmem:[#allocation2 + $0x78] sm:$0xff]
    %v107 = vld [vmem:[#allocation2 + $0x80] sm:$0xff]
    %v108 = vld [vmem:[#allocation2 + $0x88] sm:$0xff]
    %v109 = vld [vmem:[#allocation2 + $0x90] sm:$0xff]
    %v110 = vld [vmem:[#allocation2 + $0x98] sm:$0xff]
    %v111 = vld [vmem:[#allocation2 + $0xa0] sm:$0xff]
    %v112 = vld [vmem:[#allocation2 + $0xa8] sm:$0xff]
    %v113 = vld [vmem:[#allocation2 + $0xb0] sm:$0xff]
    %v114 = vld [vmem:[#allocation2 + $0xb8] sm:$0xff]
    %v115 = vld [vmem:[#allocation2 + $0xc0] sm:$0xff]
    %v116 = vld [vmem:[#allocation2 + $0xc8] sm:$0xff]
    %v117 = vld [vmem:[#allocation2 + $0xd0] sm:$0xff]
    %v118 = vld [vmem:[#allocation2 + $0xd8] sm:$0xff]
    %v119 = vld [vmem:[#allocation2 + $0xe0] sm:$0xff]
    %v120 = vld [vmem:[#allocation2 + $0xe8] sm:$0xff]
    %v121 = vld [vmem:[#allocation2 + $0xf0] sm:$0xff]
    %v122 = vld [vmem:[#allocation2 + $0xf8] sm:$0xff]
    %v123 = vld [vmem:[#allocation3] sm:$0xff]
    %v124 = vld [vmem:[#allocation3 + $0x8] sm:$0xff]
    %v125 = vld [vmem:[#allocation3 + $0x10] sm:$0xff]
    %v126 = vld [vmem:[#allocation3 + $0x18] sm:$0xff]
    %v127 = vld [vmem:[#allocation3 + $0x20] sm:$0xff]
    %v128 = vld [vmem:[#allocation3 + $0x28] sm:$0xff]
    %v129 = vld [vmem:[#allocation3 + $0x30] sm:$0xff]
    %v130 = vld [vmem:[#allocation3 + $0x38] sm:$0xff]
    %v131 = vld [vmem:[#allocation3 + $0x40] sm:$0xff]
    %v132 = vld [vmem:[#allocation3 + $0x48] sm:$0xff]
    %v133 = vld [vmem:[#allocation3 + $0x50] sm:$0xff]
    %v134 = vld [vmem:[#allocation3 + $0x58] sm:$0xff]
    %v135 = vld [vmem:[#allocation3 + $0x60] sm:$0xff]
    %v136 = vld [vmem:[#allocation3 + $0x68] sm:$0xff]
    %v137 = vld [vmem:[#allocation3 + $0x70] sm:$0xff]
    %v138 = vld [vmem:[#allocation3 + $0x78] sm:$0xff]
    %v139 = vld [vmem:[#allocation3 + $0x80] sm:$0xff]
    %v140 = vld [vmem:[#allocation3 + $0x88] sm:$0xff]
    %v141 = vld [vmem:[#allocation3 + $0x90] sm:$0xff]
    %v142 = vld [vmem:[#allocation3 + $0x98] sm:$0xff]
    %v143 = vld [vmem:[#allocation3 + $0xa0] sm:$0xff]
    %v144 = vld [vmem:[#allocation3 + $0xa8] sm:$0xff]
    %v145 = vld [vmem:[#allocation3 + $0xb0] sm:$0xff]
    %v146 = vld [vmem:[#allocation3 + $0xb8] sm:$0xff]
    %v147 = vld [vmem:[#allocation3 + $0xc0] sm:$0xff]
    %v148 = vld [vmem:[#allocation3 + $0xc8] sm:$0xff]
    %v149 = vld [vmem:[#allocation3 + $0xd0] sm:$0xff]
    %v150 = vld [vmem:[#allocation3 + $0xd8] sm:$0xff]
    %v151 = vld [vmem:[#allocation3 + $0xe0] sm:$0xff]
    %v152 = vld [vmem:[#allocation3 + $0xe8] sm:$0xff]
    %v153 = vld [vmem:[#allocation3 + $0xf0] sm:$0xff]
    %v154 = vld [vmem:[#allocation3 + $0xf8] sm:$0xff]
    %v155 = vld [vmem:[#allocation6] sm:$0xf]
    %v156 = vld [vmem:[#allocation6 + $0x4] sm:$0xf]
    %v157 = vld [vmem:[#allocation6 + $0x8] sm:$0xf]
    %v158 = vld [vmem:[#allocation6 + $0xc] sm:$0xf]
    %v159 = vld [vmem:[#allocation6 + $0x10] sm:$0xf]
    %v160 = vld [vmem:[#allocation6 + $0x14] sm:$0xf]
    %v161 = vld [vmem:[#allocation6 + $0x18] sm:$0xf]
    %v162 = vld [vmem:[#allocation6 + $0x1c] sm:$0xf]
    %v163 = vld [vmem:[#allocation6 + $0x20] sm:$0xf]
    %v164 = vld [vmem:[#allocation6 + $0x24] sm:$0xf]
    %v165 = vld [vmem:[#allocation6 + $0x28] sm:$0xf]
    %v166 = vld [vmem:[#allocation6 + $0x2c] sm:$0xf]
    %v167 = vld [vmem:[#allocation6 + $0x30] sm:$0xf]
    %v168 = vld [vmem:[#allocation6 + $0x34] sm:$0xf]
    %v169 = vld [vmem:[#allocation6 + $0x38] sm:$0xf]
    %v170 = vld [vmem:[#allocation6 + $0x3c] sm:$0xf]
    %v171 = vld [vmem:[#allocation6 + $0x40] sm:$0xf]
    %v172 = vld [vmem:[#allocation6 + $0x44] sm:$0xf]
    %v173 = vld [vmem:[#allocation6 + $0x48] sm:$0xf]
    %v174 = vld [vmem:[#allocation6 + $0x4c] sm:$0xf]
    %v175 = vld [vmem:[#allocation6 + $0x50] sm:$0xf]
    %v176 = vld [vmem:[#allocation6 + $0x54] sm:$0xf]
    %v177 = vld [vmem:[#allocation6 + $0x58] sm:$0xf]
    %v178 = vld [vmem:[#allocation6 + $0x5c] sm:$0xf]
    %v179 = vld [vmem:[#allocation6 + $0x60] sm:$0xf]
    %v180 = vld [vmem:[#allocation6 + $0x64] sm:$0xf]
    %v181 = vld [vmem:[#allocation6 + $0x68] sm:$0xf]
    %v182 = vld [vmem:[#allocation6 + $0x6c] sm:$0xf]
    %v183 = vld [vmem:[#allocation6 + $0x70] sm:$0xf]
    %v184 = vld [vmem:[#allocation6 + $0x74] sm:$0xf]
    %v185 = vld [vmem:[#allocation6 + $0x78] sm:$0xf]
    %v186 = vld [vmem:[#allocation6 + $0x7c] sm:$0xf]
    %v219 = vunpack.c.l.b16 %v123
    %v220 = vunpack.c.h.b16 %v123
    %v221 = vunpack.c.l.b16 %v124
    %v222 = vunpack.c.h.b16 %v124
    %v223 = vunpack.c.l.b16 %v125
    %v224 = vunpack.c.h.b16 %v125
    %v225 = vunpack.c.l.b16 %v126
    %v226 = vunpack.c.h.b16 %v126
    %v227 = vunpack.c.l.b16 %v127
    %v228 = vunpack.c.h.b16 %v127
    %v229 = vunpack.c.l.b16 %v128
    %v230 = vunpack.c.h.b16 %v128
    %v231 = vunpack.c.l.b16 %v129
    %v232 = vunpack.c.h.b16 %v129
    %v233 = vunpack.c.l.b16 %v130
    %v234 = vunpack.c.h.b16 %v130
    %v235 = vunpack.c.l.b16 %v131
    %v236 = vunpack.c.h.b16 %v131
    %v237 = vunpack.c.l.b16 %v132
    %v238 = vunpack.c.h.b16 %v132
    %v239 = vunpack.c.l.b16 %v133
    %v240 = vunpack.c.h.b16 %v133
    %v241 = vunpack.c.l.b16 %v134
    %v242 = vunpack.c.h.b16 %v134
    %v243 = vunpack.c.l.b16 %v135
    %v244 = vunpack.c.h.b16 %v135
    %v245 = vunpack.c.l.b16 %v136
    %v246 = vunpack.c.h.b16 %v136
    %v247 = vunpack.c.l.b16 %v137
    %v248 = vunpack.c.h.b16 %v137
    %v249 = vunpack.c.l.b16 %v138
    %v250 = vunpack.c.h.b16 %v138
    %v251 = vunpack.c.l.b16 %v139
    %v252 = vunpack.c.h.b16 %v139
    %v253 = vunpack.c.l.b16 %v140
    %v254 = vunpack.c.h.b16 %v140
    %v255 = vunpack.c.l.b16 %v141
    %v256 = vunpack.c.h.b16 %v141
    %v257 = vunpack.c.l.b16 %v142
    %v258 = vunpack.c.h.b16 %v142
    %v259 = vunpack.c.l.b16 %v143
    %v260 = vunpack.c.h.b16 %v143
    %v261 = vunpack.c.l.b16 %v144
    %v262 = vunpack.c.h.b16 %v144
    %v263 = vunpack.c.l.b16 %v145
    %v264 = vunpack.c.h.b16 %v145
    %v265 = vunpack.c.l.b16 %v146
    %v266 = vunpack.c.h.b16 %v146
    %v267 = vunpack.c.l.b16 %v147
    %v268 = vunpack.c.h.b16 %v147
    %v269 = vunpack.c.l.b16 %v148
    %v270 = vunpack.c.h.b16 %v148
    %v271 = vunpack.c.l.b16 %v149
    %v272 = vunpack.c.h.b16 %v149
    %v273 = vunpack.c.l.b16 %v150
    %v274 = vunpack.c.h.b16 %v150
    %v275 = vunpack.c.l.b16 %v151
    %v276 = vunpack.c.h.b16 %v151
    %v277 = vunpack.c.l.b16 %v152
    %v278 = vunpack.c.h.b16 %v152
    %v279 = vunpack.c.l.b16 %v153
    %v280 = vunpack.c.h.b16 %v153
    %v281 = vunpack.c.l.b16 %v154
    %v282 = vunpack.c.h.b16 %v154
    %v283 = vpack.c.b16 %v221, %v219
    %v284 = vpack.c.b16 %v222, %v220
    %v285 = vpack.c.b16 %v225, %v223
    %v286 = vpack.c.b16 %v226, %v224
    %v287 = vpack.c.b16 %v229, %v227
    %v288 = vpack.c.b16 %v230, %v228
    %v289 = vpack.c.b16 %v233, %v231
    %v290 = vpack.c.b16 %v234, %v232
    %v291 = vpack.c.b16 %v237, %v235
    %v292 = vpack.c.b16 %v238, %v236
    %v293 = vpack.c.b16 %v241, %v239
    %v294 = vpack.c.b16 %v242, %v240
    %v295 = vpack.c.b16 %v245, %v243
    %v296 = vpack.c.b16 %v246, %v244
    %v297 = vpack.c.b16 %v249, %v247
    %v298 = vpack.c.b16 %v250, %v248
    %v299 = vpack.c.b16 %v253, %v251
    %v300 = vpack.c.b16 %v254, %v252
    %v301 = vpack.c.b16 %v257, %v255
    %v302 = vpack.c.b16 %v258, %v256
    %v303 = vpack.c.b16 %v261, %v259
    %v304 = vpack.c.b16 %v262, %v260
    %v305 = vpack.c.b16 %v265, %v263
    %v306 = vpack.c.b16 %v266, %v264
    %v307 = vpack.c.b16 %v269, %v267
    %v308 = vpack.c.b16 %v270, %v268
    %v309 = vpack.c.b16 %v273, %v271
    %v310 = vpack.c.b16 %v274, %v272
    %v311 = vpack.c.b16 %v277, %v275
    %v312 = vpack.c.b16 %v278, %v276
    %v313 = vpack.c.b16 %v281, %v279
    %v314 = vpack.c.b16 %v282, %v280
    %v379 = vunpack.c.l.b16 %v155
    %v380 = vunpack.c.l.b16 %v156
    %v381 = vunpack.c.l.b16 %v157
    %v382 = vunpack.c.l.b16 %v158
    %v383 = vunpack.c.l.b16 %v159
    %v384 = vunpack.c.l.b16 %v160
    %v385 = vunpack.c.l.b16 %v161
    %v386 = vunpack.c.l.b16 %v162
    %v387 = vunpack.c.l.b16 %v163
    %v388 = vunpack.c.l.b16 %v164
    %v389 = vunpack.c.l.b16 %v165
    %v390 = vunpack.c.l.b16 %v166
    %v391 = vunpack.c.l.b16 %v167
    %v392 = vunpack.c.l.b16 %v168
    %v393 = vunpack.c.l.b16 %v169
    %v394 = vunpack.c.l.b16 %v170
    %v395 = vunpack.c.l.b16 %v171
    %v396 = vunpack.c.l.b16 %v172
    %v397 = vunpack.c.l.b16 %v173
    %v398 = vunpack.c.l.b16 %v174
    %v399 = vunpack.c.l.b16 %v175
    %v400 = vunpack.c.l.b16 %v176
    %v401 = vunpack.c.l.b16 %v177
    %v402 = vunpack.c.l.b16 %v178
    %v403 = vunpack.c.l.b16 %v179
    %v404 = vunpack.c.l.b16 %v180
    %v405 = vunpack.c.l.b16 %v181
    %v406 = vunpack.c.l.b16 %v182
    %v407 = vunpack.c.l.b16 %v183
    %v408 = vunpack.c.l.b16 %v184
    %v409 = vunpack.c.l.b16 %v185
    %v410 = vunpack.c.l.b16 %v186
    %v411 = vpack.c.b16 %v380, %v379
    %v412 = vpack.c.b16 %v382, %v381
    %v413 = vpack.c.b16 %v384, %v383
    %v414 = vpack.c.b16 %v386, %v385
    %v415 = vpack.c.b16 %v388, %v387
    %v416 = vpack.c.b16 %v390, %v389
    %v417 = vpack.c.b16 %v392, %v391
    %v418 = vpack.c.b16 %v394, %v393
    %v419 = vpack.c.b16 %v396, %v395
    %v420 = vpack.c.b16 %v398, %v397
    %v421 = vpack.c.b16 %v400, %v399
    %v422 = vpack.c.b16 %v402, %v401
    %v423 = vpack.c.b16 %v404, %v403
    %v424 = vpack.c.b16 %v406, %v405
    %v425 = vpack.c.b16 %v408, %v407
    %v426 = vpack.c.b16 %v410, %v409
    %443 = vmatprep.subr.bf16.mxu0 0
    %444 = vmatpush1.bf16.msra.mxu0 %v411
    %445 = vmatprep.subr.bf16.mxu0 0
    %446 = vmatpush1.bf16.msra.mxu0 %v412
    %447 = vmatprep.subr.bf16.mxu0 0
    %448 = vmatpush1.bf16.msra.mxu0 %v413
    %449 = vmatprep.subr.bf16.mxu0 0
    %450 = vmatpush1.bf16.msra.mxu0 %v414
    %451 = vmatprep.subr.bf16.mxu0 0
    %452 = vmatpush1.bf16.msra.mxu0 %v415
    %453 = vmatprep.subr.bf16.mxu0 0
    %454 = vmatpush1.bf16.msra.mxu0 %v416
    %455 = vmatprep.subr.bf16.mxu0 0
    %456 = vmatpush1.bf16.msra.mxu0 %v417
    %457 = vmatprep.subr.bf16.mxu0 0
    %458 = vmatpush1.bf16.msra.mxu0 %v418
    %459 = vmatprep.subr.bf16.mxu0 0
    %460 = vmatpush1.bf16.msra.mxu0 %v419
    %461 = vmatprep.subr.bf16.mxu0 0
    %462 = vmatpush1.bf16.msra.mxu0 %v420
    %463 = vmatprep.subr.bf16.mxu0 0
    %464 = vmatpush1.bf16.msra.mxu0 %v421
    %465 = vmatprep.subr.bf16.mxu0 0
    %466 = vmatpush1.bf16.msra.mxu0 %v422
    %467 = vmatprep.subr.bf16.mxu0 0
    %468 = vmatpush1.bf16.msra.mxu0 %v423
    %469 = vmatprep.subr.bf16.mxu0 0
    %470 = vmatpush1.bf16.msra.mxu0 %v424
    %471 = vmatprep.subr.bf16.mxu0 0
    %472 = vmatpush1.bf16.msra.mxu0 %v425
    %473 = vmatprep.subr.bf16.mxu0 0
    %474 = vmatpush1.bf16.msra.mxu0 %v426
    %475 = vmatprep.mubr.bf16.mxu0 %v284
    %476 = vmatmul.mubr.bf16.gmra.mrb[0].mxu0 %v283
    %v477 = vpop.f32.mrb[0].mxu0
    %v478 = vadd.f32 0.0, %v477
    %v479 = vpop.f32.mrb[0].mxu0
    %v480 = vpop.f32.mrb[0].mxu0
    %v481 = vadd.f32 0.0, %v480
    %v482 = vpop.f32.mrb[0].mxu0
    %483 = vmatprep.mubr.bf16.mxu0 %v286
    %484 = vmatmul.mubr.bf16.gmra.mrb[0].mxu0 %v285
    %v485 = vpop.f32.mrb[0].mxu0
    %v486 = vadd.f32 0.0, %v485
    %v487 = vpop.f32.mrb[0].mxu0
    %v488 = vpop.f32.mrb[0].mxu0
    %v489 = vadd.f32 0.0, %v488
    %v490 = vpop.f32.mrb[0].mxu0
    %491 = vmatprep.mubr.bf16.mxu0 %v288
    %492 = vmatmul.mubr.bf16.gmra.mrb[0].mxu0 %v287
    %v493 = vpop.f32.mrb[0].mxu0
    %v494 = vadd.f32 0.0, %v493
    %v495 = vpop.f32.mrb[0].mxu0
    %v496 = vpop.f32.mrb[0].mxu0
    %v497 = vadd.f32 0.0, %v496
    %v498 = vpop.f32.mrb[0].mxu0
    %499 = vmatprep.mubr.bf16.mxu0 %v290
    %500 = vmatmul.mubr.bf16.gmra.mrb[0].mxu0 %v289
    %v501 = vpop.f32.mrb[0].mxu0
    %v502 = vadd.f32 0.0, %v501
    %v503 = vpop.f32.mrb[0].mxu0
    %v504 = vpop.f32.mrb[0].mxu0
    %v505 = vadd.f32 0.0, %v504
    %v506 = vpop.f32.mrb[0].mxu0
    %507 = vmatprep.mubr.bf16.mxu0 %v292
    %508 = vmatmul.mubr.bf16.gmra.mrb[0].mxu0 %v291
    %v509 = vpop.f32.mrb[0].mxu0
    %v510 = vadd.f32 0.0, %v509
    %v511 = vpop.f32.mrb[0].mxu0
    %v512 = vpop.f32.mrb[0].mxu0
    %v513 = vadd.f32 0.0, %v512
    %v514 = vpop.f32.mrb[0].mxu0
    %515 = vmatprep.mubr.bf16.mxu0 %v294
    %516 = vmatmul.mubr.bf16.gmra.mrb[0].mxu0 %v293
    %v517 = vpop.f32.mrb[0].mxu0
    %v518 = vadd.f32 0.0, %v517
    %v519 = vpop.f32.mrb[0].mxu0
    %v520 = vpop.f32.mrb[0].mxu0
    %v521 = vadd.f32 0.0, %v520
    %v522 = vpop.f32.mrb[0].mxu0
    %523 = vmatprep.mubr.bf16.mxu0 %v296
    %524 = vmatmul.mubr.bf16.gmra.mrb[0].mxu0 %v295
    %v525 = vpop.f32.mrb[0].mxu0
    %v526 = vadd.f32 0.0, %v525
    %v527 = vpop.f32.mrb[0].mxu0
    %v528 = vpop.f32.mrb[0].mxu0
    %v529 = vadd.f32 0.0, %v528
    %v530 = vpop.f32.mrb[0].mxu0
    %531 = vmatprep.mubr.bf16.mxu0 %v298
    %532 = vmatmul.mubr.bf16.gmra.mrb[0].mxu0 %v297
    %v533 = vpop.f32.mrb[0].mxu0
    %v534 = vadd.f32 0.0, %v533
    %v535 = vpop.f32.mrb[0].mxu0
    %v536 = vpop.f32.mrb[0].mxu0
    %v537 = vadd.f32 0.0, %v536
    %v538 = vpop.f32.mrb[0].mxu0
    %539 = vmatprep.mubr.bf16.mxu0 %v300
    %540 = vmatmul.mubr.bf16.gmra.mrb[0].mxu0 %v299
    %v541 = vpop.f32.mrb[0].mxu0
    %v542 = vadd.f32 0.0, %v541
    %v543 = vpop.f32.mrb[0].mxu0
    %v544 = vpop.f32.mrb[0].mxu0
    %v545 = vadd.f32 0.0, %v544
    %v546 = vpop.f32.mrb[0].mxu0
    %547 = vmatprep.mubr.bf16.mxu0 %v302
    %548 = vmatmul.mubr.bf16.gmra.mrb[0].mxu0 %v301
    %v549 = vpop.f32.mrb[0].mxu0
    %v550 = vadd.f32 0.0, %v549
    %v551 = vpop.f32.mrb[0].mxu0
    %v552 = vpop.f32.mrb[0].mxu0
    %v553 = vadd.f32 0.0, %v552
    %v554 = vpop.f32.mrb[0].mxu0
    %555 = vmatprep.mubr.bf16.mxu0 %v304
    %556 = vmatmul.mubr.bf16.gmra.mrb[0].mxu0 %v303
    %v557 = vpop.f32.mrb[0].mxu0
    %v558 = vadd.f32 0.0, %v557
    %v559 = vpop.f32.mrb[0].mxu0
    %v560 = vpop.f32.mrb[0].mxu0
    %v561 = vadd.f32 0.0, %v560
    %v562 = vpop.f32.mrb[0].mxu0
    %563 = vmatprep.mubr.bf16.mxu0 %v306
    %564 = vmatmul.mubr.bf16.gmra.mrb[0].mxu0 %v305
    %v565 = vpop.f32.mrb[0].mxu0
    %v566 = vadd.f32 0.0, %v565
    %v567 = vpop.f32.mrb[0].mxu0
    %v568 = vpop.f32.mrb[0].mxu0
    %v569 = vadd.f32 0.0, %v568
    %v570 = vpop.f32.mrb[0].mxu0
    %571 = vmatprep.mubr.bf16.mxu0 %v308
    %572 = vmatmul.mubr.bf16.gmra.mrb[0].mxu0 %v307
    %v573 = vpop.f32.mrb[0].mxu0
    %v574 = vadd.f32 0.0, %v573
    %v575 = vpop.f32.mrb[0].mxu0
    %v576 = vpop.f32.mrb[0].mxu0
    %v577 = vadd.f32 0.0, %v576
    %v578 = vpop.f32.mrb[0].mxu0
    %579 = vmatprep.mubr.bf16.mxu0 %v310
    %580 = vmatmul.mubr.bf16.gmra.mrb[0].mxu0 %v309
    %v581 = vpop.f32.mrb[0].mxu0
    %v582 = vadd.f32 0.0, %v581
    %v583 = vpop.f32.mrb[0].mxu0
    %v584 = vpop.f32.mrb[0].mxu0
    %v585 = vadd.f32 0.0, %v584
    %v586 = vpop.f32.mrb[0].mxu0
    %587 = vmatprep.mubr.bf16.mxu0 %v312
    %588 = vmatmul.mubr.bf16.gmra.mrb[0].mxu0 %v311
    %v589 = vpop.f32.mrb[0].mxu0
    %v590 = vadd.f32 0.0, %v589
    %v591 = vpop.f32.mrb[0].mxu0
    %v592 = vpop.f32.mrb[0].mxu0
    %v593 = vadd.f32 0.0, %v592
    %v594 = vpop.f32.mrb[0].mxu0
    %595 = vmatprep.mubr.bf16.mxu0 %v314
    %596 = vmatmul.mubr.bf16.gmra.mrb[0].mxu0 %v313
    %v597 = vpop.f32.mrb[0].mxu0
    %v598 = vadd.f32 0.0, %v597
    %v599 = vpop.f32.mrb[0].mxu0
    %v600 = vpop.f32.mrb[0].mxu0
    %v601 = vadd.f32 0.0, %v600
    %v602 = vpop.f32.mrb[0].mxu0
    %603 = vdwg.mxu0
    %v604 = vadd.f32 %v91, %v478
    %v605 = vadd.f32 %v92, %v481
    %v606 = vadd.f32 %v93, %v486
    %v607 = vadd.f32 %v94, %v489
    %v608 = vadd.f32 %v95, %v494
    %v609 = vadd.f32 %v96, %v497
    %v610 = vadd.f32 %v97, %v502
    %v611 = vadd.f32 %v98, %v505
    %v612 = vadd.f32 %v99, %v510
    %v613 = vadd.f32 %v100, %v513
    %v614 = vadd.f32 %v101, %v518
    %v615 = vadd.f32 %v102, %v521
    %v616 = vadd.f32 %v103, %v526
    %v617 = vadd.f32 %v104, %v529
    %v618 = vadd.f32 %v105, %v534
    %v619 = vadd.f32 %v106, %v537
    %v620 = vadd.f32 %v107, %v542
    %v621 = vadd.f32 %v108, %v545
    %v622 = vadd.f32 %v109, %v550
    %v623 = vadd.f32 %v110, %v553
    %v624 = vadd.f32 %v111, %v558
    %v625 = vadd.f32 %v112, %v561
    %v626 = vadd.f32 %v113, %v566
    %v627 = vadd.f32 %v114, %v569
    %v628 = vadd.f32 %v115, %v574
    %v629 = vadd.f32 %v116, %v577
    %v630 = vadd.f32 %v117, %v582
    %v631 = vadd.f32 %v118, %v585
    %v632 = vadd.f32 %v119, %v590
    %v633 = vadd.f32 %v120, %v593
    %v634 = vadd.f32 %v121, %v598
    %v635 = vadd.f32 %v122, %v601
    %636 = vst [vmem:[#allocation2] sm:$0xff] %v604
    %637 = vst [vmem:[#allocation2 + $0x8] sm:$0xff] %v605
    %638 = vst [vmem:[#allocation2 + $0x10] sm:$0xff] %v606
    %639 = vst [vmem:[#allocation2 + $0x18] sm:$0xff] %v607
    %640 = vst [vmem:[#allocation2 + $0x20] sm:$0xff] %v608
    %641 = vst [vmem:[#allocation2 + $0x28] sm:$0xff] %v609
    %642 = vst [vmem:[#allocation2 + $0x30] sm:$0xff] %v610
    %643 = vst [vmem:[#allocation2 + $0x38] sm:$0xff] %v611
    %644 = vst [vmem:[#allocation2 + $0x40] sm:$0xff] %v612
    %645 = vst [vmem:[#allocation2 + $0x48] sm:$0xff] %v613
    %646 = vst [vmem:[#allocation2 + $0x50] sm:$0xff] %v614
    %647 = vst [vmem:[#allocation2 + $0x58] sm:$0xff] %v615
    %648 = vst [vmem:[#allocation2 + $0x60] sm:$0xff] %v616
    %649 = vst [vmem:[#allocation2 + $0x68] sm:$0xff] %v617
    %650 = vst [vmem:[#allocation2 + $0x70] sm:$0xff] %v618
    %651 = vst [vmem:[#allocation2 + $0x78] sm:$0xff] %v619
    %652 = vst [vmem:[#allocation2 + $0x80] sm:$0xff] %v620
    %653 = vst [vmem:[#allocation2 + $0x88] sm:$0xff] %v621
    %654 = vst [vmem:[#allocation2 + $0x90] sm:$0xff] %v622
    %655 = vst [vmem:[#allocation2 + $0x98] sm:$0xff] %v623
    %656 = vst [vmem:[#allocation2 + $0xa0] sm:$0xff] %v624
    %657 = vst [vmem:[#allocation2 + $0xa8] sm:$0xff] %v625
    %658 = vst [vmem:[#allocation2 + $0xb0] sm:$0xff] %v626
    %659 = vst [vmem:[#allocation2 + $0xb8] sm:$0xff] %v627
    %660 = vst [vmem:[#allocation2 + $0xc0] sm:$0xff] %v628
    %661 = vst [vmem:[#allocation2 + $0xc8] sm:$0xff] %v629
    %662 = vst [vmem:[#allocation2 + $0xd0] sm:$0xff] %v630
    %663 = vst [vmem:[#allocation2 + $0xd8] sm:$0xff] %v631
    %664 = vst [vmem:[#allocation2 + $0xe0] sm:$0xff] %v632
    %665 = vst [vmem:[#allocation2 + $0xe8] sm:$0xff] %v633
    %666 = vst [vmem:[#allocation2 + $0xf0] sm:$0xff] %v634
    %667 = vst [vmem:[#allocation2 + $0xf8] sm:$0xff] %v635
    // Predicated region
    $region30: #{stock_gnn_forward.2} parent=1 // pred_check
      %p668 = pneg %p55
    $region31: #{stock_gnn_forward.2} parent=1 // pred_check_branch
      %670 = sbr.rel (%p668) target = $region33
    $region32: #{stock_gnn_forward.2} parent=1 // pred_region
      %v671 = vld [vmem:[#allocation2] sm:$0xff]
      %v672 = vld [vmem:[#allocation2 + $0x8] sm:$0xff]
      %v673 = vld [vmem:[#allocation2 + $0x10] sm:$0xff]
      %v674 = vld [vmem:[#allocation2 + $0x18] sm:$0xff]
      %v675 = vld [vmem:[#allocation2 + $0x20] sm:$0xff]
      %v676 = vld [vmem:[#allocation2 + $0x28] sm:$0xff]
      %v677 = vld [vmem:[#allocation2 + $0x30] sm:$0xff]
      %v678 = vld [vmem:[#allocation2 + $0x38] sm:$0xff]
      %v679 = vld [vmem:[#allocation2 + $0x40] sm:$0xff]
      %v680 = vld [vmem:[#allocation2 + $0x48] sm:$0xff]
      %v681 = vld [vmem:[#allocation2 + $0x50] sm:$0xff]
      %v682 = vld [vmem:[#allocation2 + $0x58] sm:$0xff]
      %v683 = vld [vmem:[#allocation2 + $0x60] sm:$0xff]
      %v684 = vld [vmem:[#allocation2 + $0x68] sm:$0xff]
      %v685 = vld [vmem:[#allocation2 + $0x70] sm:$0xff]
      %v686 = vld [vmem:[#allocation2 + $0x78] sm:$0xff]
      %v687 = vld [vmem:[#allocation2 + $0x80] sm:$0xff]
      %v688 = vld [vmem:[#allocation2 + $0x88] sm:$0xff]
      %v689 = vld [vmem:[#allocation2 + $0x90] sm:$0xff]
      %v690 = vld [vmem:[#allocation2 + $0x98] sm:$0xff]
      %v691 = vld [vmem:[#allocation2 + $0xa0] sm:$0xff]
      %v692 = vld [vmem:[#allocation2 + $0xa8] sm:$0xff]
      %v693 = vld [vmem:[#allocation2 + $0xb0] sm:$0xff]
      %v694 = vld [vmem:[#allocation2 + $0xb8] sm:$0xff]
      %v695 = vld [vmem:[#allocation2 + $0xc0] sm:$0xff]
      %v696 = vld [vmem:[#allocation2 + $0xc8] sm:$0xff]
      %v697 = vld [vmem:[#allocation2 + $0xd0] sm:$0xff]
      %v698 = vld [vmem:[#allocation2 + $0xd8] sm:$0xff]
      %v699 = vld [vmem:[#allocation2 + $0xe0] sm:$0xff]
      %v700 = vld [vmem:[#allocation2 + $0xe8] sm:$0xff]
      %v701 = vld [vmem:[#allocation2 + $0xf0] sm:$0xff]
      %v702 = vld [vmem:[#allocation2 + $0xf8] sm:$0xff]
      %v703 = vld [vmem:[#allocation8] sm:$0x1]
      %v705 = vlaneseq
      %v706 = vshrl.u32 %v705, 7
      %v707 = vsub.s32 0, %v706
      %v708 = vrot.slane %v703, %v707
      %v710 = vadd.f32 %v671, %v708
      %v711 = vadd.f32 %v672, %v708
      %v712 = vadd.f32 %v673, %v708
      %v713 = vadd.f32 %v674, %v708
      %v714 = vadd.f32 %v675, %v708
      %v715 = vadd.f32 %v676, %v708
      %v716 = vadd.f32 %v677, %v708
      %v717 = vadd.f32 %v678, %v708
      %v718 = vadd.f32 %v679, %v708
      %v719 = vadd.f32 %v680, %v708
      %v720 = vadd.f32 %v681, %v708
      %v721 = vadd.f32 %v682, %v708
      %v722 = vadd.f32 %v683, %v708
      %v723 = vadd.f32 %v684, %v708
      %v724 = vadd.f32 %v685, %v708
      %v725 = vadd.f32 %v686, %v708
      %v726 = vadd.f32 %v687, %v708
      %v727 = vadd.f32 %v688, %v708
      %v728 = vadd.f32 %v689, %v708
      %v729 = vadd.f32 %v690, %v708
      %v730 = vadd.f32 %v691, %v708
      %v731 = vadd.f32 %v692, %v708
      %v732 = vadd.f32 %v693, %v708
      %v733 = vadd.f32 %v694, %v708
      %v734 = vadd.f32 %v695, %v708
      %v735 = vadd.f32 %v696, %v708
      %v736 = vadd.f32 %v697, %v708
      %v737 = vadd.f32 %v698, %v708
      %v738 = vadd.f32 %v699, %v708
      %v739 = vadd.f32 %v700, %v708
      %v740 = vadd.f32 %v701, %v708
      %v741 = vadd.f32 %v702, %v708
      %v742 = vmax.f32 %v710, 0.0
      %v743 = vmax.f32 %v711, 0.0
      %v744 = vmax.f32 %v712, 0.0
      %v745 = vmax.f32 %v713, 0.0
      %v746 = vmax.f32 %v714, 0.0
      %v747 = vmax.f32 %v715, 0.0
      %v748 = vmax.f32 %v716, 0.0
      %v749 = vmax.f32 %v717, 0.0
      %v750 = vmax.f32 %v718, 0.0
      %v751 = vmax.f32 %v719, 0.0
      %v752 = vmax.f32 %v720, 0.0
      %v753 = vmax.f32 %v721, 0.0
      %v754 = vmax.f32 %v722, 0.0
      %v755 = vmax.f32 %v723, 0.0
      %v756 = vmax.f32 %v724, 0.0
      %v757 = vmax.f32 %v725, 0.0
      %v758 = vmax.f32 %v726, 0.0
      %v759 = vmax.f32 %v727, 0.0
      %v760 = vmax.f32 %v728, 0.0
      %v761 = vmax.f32 %v729, 0.0
      %v762 = vmax.f32 %v730, 0.0
      %v763 = vmax.f32 %v731, 0.0
      %v764 = vmax.f32 %v732, 0.0
      %v765 = vmax.f32 %v733, 0.0
      %v766 = vmax.f32 %v734, 0.0
      %v767 = vmax.f32 %v735, 0.0
      %v768 = vmax.f32 %v736, 0.0
      %v769 = vmax.f32 %v737, 0.0
      %v770 = vmax.f32 %v738, 0.0
      %v771 = vmax.f32 %v739, 0.0
      %v772 = vmax.f32 %v740, 0.0
      %v773 = vmax.f32 %v741, 0.0
      %v774 = vpack.c.bf16 %v743, %v742
      %v775 = vpack.c.bf16 %v745, %v744
      %v776 = vpack.c.bf16 %v747, %v746
      %v777 = vpack.c.bf16 %v749, %v748
      %v778 = vpack.c.bf16 %v751, %v750
      %v779 = vpack.c.bf16 %v753, %v752
      %v780 = vpack.c.bf16 %v755, %v754
      %v781 = vpack.c.bf16 %v757, %v756
      %v782 = vpack.c.bf16 %v759, %v758
      %v783 = vpack.c.bf16 %v761, %v760
      %v784 = vpack.c.bf16 %v763, %v762
      %v785 = vpack.c.bf16 %v765, %v764
      %v786 = vpack.c.bf16 %v767, %v766
      %v787 = vpack.c.bf16 %v769, %v768
      %v788 = vpack.c.bf16 %v771, %v770
      %v789 = vpack.c.bf16 %v773, %v772
      %v806 = vunpack.c.l.b16 %v774
      %v807 = vunpack.c.h.b16 %v774
      %v808 = vunpack.c.l.b16 %v775
      %v809 = vunpack.c.h.b16 %v775
      %v810 = vunpack.c.l.b16 %v776
      %v811 = vunpack.c.h.b16 %v776
      %v812 = vunpack.c.l.b16 %v777
      %v813 = vunpack.c.h.b16 %v777
      %v814 = vunpack.c.l.b16 %v778
      %v815 = vunpack.c.h.b16 %v778
      %v816 = vunpack.c.l.b16 %v779
      %v817 = vunpack.c.h.b16 %v779
      %v818 = vunpack.c.l.b16 %v780
      %v819 = vunpack.c.h.b16 %v780
      %v820 = vunpack.c.l.b16 %v781
      %v821 = vunpack.c.h.b16 %v781
      %v822 = vunpack.c.l.b16 %v782
      %v823 = vunpack.c.h.b16 %v782
      %v824 = vunpack.c.l.b16 %v783
      %v825 = vunpack.c.h.b16 %v783
      %v826 = vunpack.c.l.b16 %v784
      %v827 = vunpack.c.h.b16 %v784
      %v828 = vunpack.c.l.b16 %v785
      %v829 = vunpack.c.h.b16 %v785
      %v830 = vunpack.c.l.b16 %v786
      %v831 = vunpack.c.h.b16 %v786
      %v832 = vunpack.c.l.b16 %v787
      %v833 = vunpack.c.h.b16 %v787
      %v834 = vunpack.c.l.b16 %v788
      %v835 = vunpack.c.h.b16 %v788
      %v836 = vunpack.c.l.b16 %v789
      %v837 = vunpack.c.h.b16 %v789
      %v838 = vpack.c.b16 %v806, %v806
      %v839 = vpack.c.b16 %v807, %v807
      %v840 = vpack.c.b16 %v808, %v808
      %v841 = vpack.c.b16 %v809, %v809
      %v842 = vpack.c.b16 %v810, %v810
      %v843 = vpack.c.b16 %v811, %v811
      %v844 = vpack.c.b16 %v812, %v812
      %v845 = vpack.c.b16 %v813, %v813
      %v846 = vpack.c.b16 %v814, %v814
      %v847 = vpack.c.b16 %v815, %v815
      %v848 = vpack.c.b16 %v816, %v816
      %v849 = vpack.c.b16 %v817, %v817
      %v850 = vpack.c.b16 %v818, %v818
      %v851 = vpack.c.b16 %v819, %v819
      %v852 = vpack.c.b16 %v820, %v820
      %v853 = vpack.c.b16 %v821, %v821
      %v854 = vpack.c.b16 %v822, %v822
      %v855 = vpack.c.b16 %v823, %v823
      %v856 = vpack.c.b16 %v824, %v824
      %v857 = vpack.c.b16 %v825, %v825
      %v858 = vpack.c.b16 %v826, %v826
      %v859 = vpack.c.b16 %v827, %v827
      %v860 = vpack.c.b16 %v828, %v828
      %v861 = vpack.c.b16 %v829, %v829
      %v862 = vpack.c.b16 %v830, %v830
      %v863 = vpack.c.b16 %v831, %v831
      %v864 = vpack.c.b16 %v832, %v832
      %v865 = vpack.c.b16 %v833, %v833
      %v866 = vpack.c.b16 %v834, %v834
      %v867 = vpack.c.b16 %v835, %v835
      %v868 = vpack.c.b16 %v836, %v836
      %v869 = vpack.c.b16 %v837, %v837
      %902 = vst [vmem:[#allocation9] sm:$0xf] %v838
      %903 = vst [vmem:[#allocation9 + $0x4] sm:$0xf] %v839
      %904 = vst [vmem:[#allocation9 + $0x8] sm:$0xf] %v840
      %905 = vst [vmem:[#allocation9 + $0xc] sm:$0xf] %v841
      %906 = vst [vmem:[#allocation9 + $0x10] sm:$0xf] %v842
      %907 = vst [vmem:[#allocation9 + $0x14] sm:$0xf] %v843
      %908 = vst [vmem:[#allocation9 + $0x18] sm:$0xf] %v844
      %909 = vst [vmem:[#allocation9 + $0x1c] sm:$0xf] %v845
      %910 = vst [vmem:[#allocation9 + $0x20] sm:$0xf] %v846
      %911 = vst [vmem:[#allocation9 + $0x24] sm:$0xf] %v847
      %912 = vst [vmem:[#allocation9 + $0x28] sm:$0xf] %v848
      %913 = vst [vmem:[#allocation9 + $0x2c] sm:$0xf] %v849
      %914 = vst [vmem:[#allocation9 + $0x30] sm:$0xf] %v850
      %915 = vst [vmem:[#allocation9 + $0x34] sm:$0xf] %v851
      %916 = vst [vmem:[#allocation9 + $0x38] sm:$0xf] %v852
      %917 = vst [vmem:[#allocation9 + $0x3c] sm:$0xf] %v853
      %918 = vst [vmem:[#allocation9 + $0x40] sm:$0xf] %v854
      %919 = vst [vmem:[#allocation9 + $0x44] sm:$0xf] %v855
      %920 = vst [vmem:[#allocation9 + $0x48] sm:$0xf] %v856
      %921 = vst [vmem:[#allocation9 + $0x4c] sm:$0xf] %v857
      %922 = vst [vmem:[#allocation9 + $0x50] sm:$0xf] %v858
      %923 = vst [vmem:[#allocation9 + $0x54] sm:$0xf] %v859
      %924 = vst [vmem:[#allocation9 + $0x58] sm:$0xf] %v860
      %925 = vst [vmem:[#allocation9 + $0x5c] sm:$0xf] %v861
      %926 = vst [vmem:[#allocation9 + $0x60] sm:$0xf] %v862
      %927 = vst [vmem:[#allocation9 + $0x64] sm:$0xf] %v863
      %928 = vst [vmem:[#allocation9 + $0x68] sm:$0xf] %v864
      %929 = vst [vmem:[#allocation9 + $0x6c] sm:$0xf] %v865
      %930 = vst [vmem:[#allocation9 + $0x70] sm:$0xf] %v866
      %931 = vst [vmem:[#allocation9 + $0x74] sm:$0xf] %v867
      %932 = vst [vmem:[#allocation9 + $0x78] sm:$0xf] %v868
      %933 = vst [vmem:[#allocation9 + $0x7c] sm:$0xf] %v869
    $region33: #{stock_gnn_forward.2} parent=1 // pred_fallthru
      _
    // Predicated region
    $region34: #{stock_gnn_forward.2} parent=1 // pred_check
      _
    $region35: #{stock_gnn_forward.2} parent=1 // pred_check_branch
      %935 = sbr.rel (0) target = $region37
    $region36: #{stock_gnn_forward.2} parent=1 // pred_region
      %s937 = ssub.s32 2048, 2048
      %938 = vsyncadd [#allocation5], %s937
      %s939 = sshll.u32 [#allocation9], 4
      %s940 = int_to_ptr.vmem [resolvable:$true] %s939
      %945 = dma.vmem_to_hbm [thread:$0]  %s940, 2048, %s3, [#allocation5], 64, 64, 4
    $region37: #{stock_gnn_forward.2} parent=1 // pred_fallthru
      _
    // Predicated region
    $region38: #{stock_gnn_forward.2} parent=1 // pred_check
      _
    $region39: #{stock_gnn_forward.2} parent=1 // pred_check_branch
      %947 = sbr.rel (0) target = $region41
    $region40: #{stock_gnn_forward.2} parent=1 // pred_region
      %948 = dma.done [#allocation5], 2048
    $region41: #{stock_gnn_forward.2} parent=1 // pred_fallthru
      _
    %949 = vsyncpa [#allocation4], 1
    %950 = vsyncpa [#allocation7], 1
    %951 = vsyncpa [#allocation5], 1

</llo_original>
